<compile_context>
chip_gen: v7x
topology: tpu7x:2x2x1
jax: 0.10.0
libtpu: 0.0.40
codegen_flags: <defaults>
</compile_context>

<pallas_src>
import functools
import math

import jax
import jax.numpy as jnp
from jax import lax
from jax.experimental import pallas as pl
from jax.experimental.pallas import tpu as pltpu


# ----------------------------------------------------------------------------- Pallas kernel
def _pointnet_conv_kernel(feat_ref, w1_ref, b1_ref, w2_ref, b2_ref, s2_ref, t2_ref, o_ref,
                          *, hidden):
    """Per-edge MLP (Lin->ReLU->[BN1 folded], Lin->ReLU->BN2) + max aggregation over K neighbors.

    feat_ref : (tm*R, 128) bf16  lane-dense packed edge features; each 128-lane row holds
                                 P = 128/cp edges (cp features each) of one query, R rows/query.
    w1_ref   : (128, P*H)  bf16  block-diagonal kron(I_P, W1)
    b1_ref   : (1, P*H)    f32   lane-tiled bias
    w2_ref   : (P*H, P*H)  bf16  block-diagonal kron(I_P, diag(s1) @ W2)   (BN1 folded in)
    b2_ref, s2_ref, t2_ref : (1, P*H) f32   lane-tiled bias / BN2 eval-mode scale & shift
    o_ref    : (tm, 128)   f32   per-query channel max, replicated across the 128/H lane groups
    """
    rows = feat_ref.shape[0]
    tm = o_ref.shape[0]
    r_per_q = rows // tm

    # layer 1: Linear -> ReLU   (contraction = 128: full MXU rows; BN1 was folded into layer 2)
    h = jnp.dot(feat_ref[...], w1_ref[...], preferred_element_type=jnp.float32) + b1_ref[...]
    h = jnp.maximum(h, 0.0)

    # layer 2: Linear -> ReLU -> BN2 (eval-mode scale/shift, applied per edge before aggregation)
    h = jnp.dot(h.astype(w2_ref.dtype), w2_ref[...],
                preferred_element_type=jnp.float32) + b2_ref[...]
    h = jnp.maximum(h, 0.0)
    h = h * s2_ref[...] + t2_ref[...]

    # --- max aggregation over the K neighbors (no mask: padded slots duplicate the self edge) ---
    # (a) vreg-aligned lane halvings P*H -> 128  (channel positions stay aligned modulo H)
    while h.shape[1] > 128:
        half = h.shape[1] // 2
        h = jnp.maximum(h[:, :half], h[:, half:])
    # (b) fold the remaining 128/H lane groups with XLU rolls (result replicated in every group)
    shift = 64
    while shift >= hidden:
        h = jnp.maximum(h, pltpu.roll(h, shift=shift, axis=1))
        shift //= 2
    # (c) fold the R packed rows belonging to the same query (sublane reduce)
    o_ref[...] = jnp.max(h.reshape(tm, r_per_q, 128), axis=1)


def _padded_feature_dim(cin):
    """Pad the per-edge feature count to a power of two >= 8 (so 128 % cp == 0)."""
    return max(8, 1 << (max(cin, 1) - 1).bit_length())


def pointnet_conv(feat, params, *, tm=512):
    """feat: (M, K, Cin) f32 gathered edge features -> (M, H) f32 aggregated query features."""
    M, K, cin = feat.shape
    H = params["w2"].shape[1]

    cp = _padded_feature_dim(cin)
    assert cp <= 128 and 128 % cp == 0
    P = 128 // cp                               # edges packed per 128-lane row
    assert K % P == 0, "neighbor count must be padded to a multiple of 128/cp (with self indices)"
    R = (K * cp) // 128                         # packed feat rows per query
    PH = P * H
    assert 128 % H == 0 and H >= cp and PH % 128 == 0

    # --- tile size: multiple of 8, not bigger than needed; for small M shrink so the "parallel"
    #     grid has >= 2 steps (v7x has two TensorCores -> a 1-tile grid leaves one idle).
    tm = max(8, min(int(tm), ((M + 7) // 8) * 8))
    tm -= tm % 8
    if (M + tm - 1) // tm < 2 and tm >= 16:
        tm //= 2
        tm -= tm % 8
    m_pad = ((M + tm - 1) // tm) * tm

    # --- lane-dense packed feat: (m_pad, K, cp) -> (m_pad*R, 128) bf16 (row-major reshape) -------
    feat_p = jnp.zeros((m_pad, K, cp), jnp.bfloat16)
    feat_p = feat_p.at[:M, :, :cin].set(feat.astype(jnp.bfloat16))
    feat_p = feat_p.reshape(m_pad * R, 128)

    # --- block-diagonal weights: P identical blocks so 16 edges share each matmul row -----------
    # Fold BN1 (eval-mode scale s1 / shift t1) into layer 2 (exact algebra):
    #   (relu1 * s1 + t1) @ W2 + b2 == relu1 @ (diag(s1) @ W2) + (t1 @ W2 + b2)
    w1p = jnp.zeros((cp, H), jnp.float32).at[:cin, :].set(params["w1"])
    w2f = params["s1"].T * params["w2"]
    eye_p = jnp.eye(P, dtype=jnp.float32)
    w1_bd = jnp.kron(eye_p, w1p).astype(jnp.bfloat16)                       # (128, PH)
    w2_bd = jnp.kron(eye_p, w2f).astype(jnp.bfloat16)                       # (PH, PH)
    b1_bd = jnp.tile(params["b1"], (1, P))                                  # (1, PH) f32
    b2_bd = jnp.tile(params["t1"] @ params["w2"] + params["b2"], (1, P))
    s2_bd = jnp.tile(params["s2"], (1, P))
    t2_bd = jnp.tile(params["t2"], (1, P))

    full = lambda a: pl.BlockSpec(a.shape, lambda i: (0,) * a.ndim)

    # --- generation-aware scoped-VMEM request (v7x: 64 MiB physical / 32 MiB scoped default) ----
    feat_buf = tm * R * 128 * 2
    out_buf = tm * 128 * 4
    w_bytes = (128 * PH + PH * PH) * 2 + 4 * PH * 4
    interm = tm * R * PH * 10                     # h1 f32 + h1 bf16 + h2 f32 upper bound
    est = 2 * (feat_buf + out_buf + w_bytes) + interm + (4 << 20)
    try:
        cap = int(getattr(pltpu.get_tpu_info(), "vmem_capacity_bytes", 64 << 20))
    except Exception:  # be robust if the query is unavailable; assume the smallest (v7x) VMEM
        cap = 64 << 20
    vmem_limit = int(min(max(est, 32 << 20), max(32 << 20, cap - (16 << 20)), 112 << 20))

    kernel = functools.partial(_pointnet_conv_kernel, hidden=H)
    packed = pl.pallas_call(
        kernel,
        out_shape=jax.ShapeDtypeStruct((m_pad, 128), jnp.float32),
        grid_spec=pltpu.PrefetchScalarGridSpec(
            num_scalar_prefetch=0,
            grid=(m_pad // tm,),
            in_specs=[
                pl.BlockSpec((tm * R, 128), lambda i: (i, 0)),
                # constant-index operands: the pipeline re-uses the block when the index map
                # output is unchanged, so these are fetched once (no per-step re-DMA).
                full(w1_bd), full(b1_bd), full(w2_bd), full(b2_bd), full(s2_bd), full(t2_bd),
            ],
            out_specs=pl.BlockSpec((tm, 128), lambda i: (i, 0)),
        ),
        compiler_params=pltpu.CompilerParams(
            dimension_semantics=("parallel",),        # v7x shards the query tiles across its 2 TCs
            vmem_limit_bytes=vmem_limit),
    )(feat_p, w1_bd, b1_bd, w2_bd, b2_bd, s2_bd, t2_bd)

    # every 128-lane output row holds the per-channel max replicated across lane groups;
    # keep the first H channels and drop the padded queries (cheap XLA slice).
    return packed[:M, :H]


def pointnet_conv_ref(feat, params):
    """Unfused f32 reference: (Lin->ReLU->BN1, Lin->ReLU->BN2) per edge + max over K."""
    h = jnp.maximum(feat @ params["w1"] + params["b1"], 0.0)
    h = h * params["s1"] + params["t1"]
    h = jnp.maximum(h @ params["w2"] + params["b2"], 0.0)
    h = h * params["s2"] + params["t2"]
    return jnp.max(h, axis=1)


# ----------------------------------------------------------------------------- glue (plain JAX)
def fps_segment(pos_seg, num_samples):
    """Farthest point sampling inside one batch segment (deterministic start at index 0)."""
    # TODO(synk): torch_geometric.fps uses a random start point (random_start=True);
    # we start at the first point of the segment for determinism.
    n = pos_seg.shape[0]

    def body(i, carry):
        sel, mind = carry
        last = pos_seg[sel[i - 1]]
        d = jnp.sum((pos_seg - last[None, :]) ** 2, axis=-1)
        mind = jnp.minimum(mind, d)
        sel = sel.at[i].set(jnp.argmax(mind).astype(jnp.int32))
        return sel, mind

    sel0 = jnp.zeros((num_samples,), jnp.int32)
    mind0 = jnp.full((n,), jnp.inf, jnp.float32)
    sel, _ = lax.fori_loop(1, num_samples, body, (sel0, mind0))
    return sel


def radius_neighbors(pos, batch, pos_q, batch_q, idx_q, r, k):
    """k nearest neighbors within radius r and same batch; invalid slots -> the query's own index."""
    # TODO(synk): torch_cluster.radius keeps the *first* max_num_neighbors found (order
    # unspecified); here we deterministically keep the k nearest within r.
    d2 = jnp.sum((pos_q[:, None, :] - pos[None, :, :]) ** 2, axis=-1)
    valid = (d2 <= r * r) & (batch_q[:, None] == batch[None, :])
    d2m = jnp.where(valid, d2, jnp.inf)
    _, order = lax.top_k(-d2m, k)                           # k nearest (invalid sorted last)
    nbr_valid = jnp.take_along_axis(valid, order, axis=1)
    # Self (distance 0, same batch) is always a valid neighbor, so padding invalid slots with the
    # query's own point index keeps the max-aggregation result identical (no mask needed).
    nbr_idx = jnp.where(nbr_valid, order, idx_q[:, None])
    return nbr_idx.astype(jnp.int32)


def sa_module_forward(params, x, pos, batch, seg_counts, *, ratio, r, max_neighbors=64, tm=512):
    """SAModule.forward: returns (x_out, pos_out, batch_out)."""
    N = pos.shape[0]

    # --- fps(pos, batch, ratio) --------------------------------------------------
    idx_parts, off = [], 0
    for n_b in seg_counts:
        m_b = int(math.ceil(ratio * n_b))
        idx_parts.append(fps_segment(lax.dynamic_slice_in_dim(pos, off, n_b, 0), m_b) + off)
        off += n_b
    idx = jnp.concatenate(idx_parts, axis=0)

    pos_q = pos[idx]
    batch_q = batch[idx]
    M = idx.shape[0]

    # --- radius(pos, pos[idx], r, batch, batch[idx], max_num_neighbors=64) --------
    cin = x.shape[1] + 3
    cp = _padded_feature_dim(cin)
    P = 128 // cp
    k_r = min(max_neighbors, N)
    K = ((k_r + P - 1) // P) * P                     # pad neighbor slots to a multiple of 128/cp
    nbr_idx = radius_neighbors(pos, batch, pos_q, batch_q, idx, r, k_r)
    if K > k_r:                                      # extra slots duplicate the (safe) self edge
        nbr_idx = jnp.concatenate(
            [nbr_idx, jnp.broadcast_to(idx[:, None], (M, K - k_r))], axis=1)

    # --- PointNetConv message build: concat([x_j, pos_j - pos_i]) -----------------
    # TODO(synk): for large N, fuse this gather into the Pallas kernel (scalar-prefetch nbr_idx
    # and gather x/pos rows in-kernel) instead of materializing the (M, K, C+3) tensor in HBM.
    # TODO(synk): PyG PointNetConv(add_self_loops=True) adds (i, i) self-loops; each query
    # already contains itself as a radius neighbor (distance 0), so that quirk is omitted.
    x_j = x[nbr_idx]                                  # (M, K, C)
    rel = pos[nbr_idx] - pos_q[:, None, :]            # (M, K, 3)
    feat = jnp.concatenate([x_j, rel], axis=-1).astype(jnp.float32)

    # --- hot path: per-edge MLP + max aggregation (Pallas) ------------------------
    x_out = pointnet_conv(feat, params, tm=tm)
    return x_out, pos_q, batch_q


def init_params(key, cin, hidden):
    """Deterministic params for NN = MLP([cin, hidden, hidden]) (Lin->ReLU->BN per layer, eval mode)."""
    ks = jax.random.split(key, 8)
    eps = 1e-5

    def lin(kw, kb, fan_in, fan_out):
        bound = 1.0 / math.sqrt(fan_in)
        w = jax.random.uniform(kw, (fan_in, fan_out), jnp.float32, -bound, bound)
        b = jax.random.uniform(kb, (1, fan_out), jnp.float32, -bound, bound)
        return w, b

    def bn(kg, kb, c):
        gamma = 1.0 + 0.1 * jax.random.normal(kg, (1, c), jnp.float32)
        beta = 0.1 * jax.random.normal(kb, (1, c), jnp.float32)
        run_mean = jnp.zeros((1, c), jnp.float32)
        run_var = jnp.ones((1, c), jnp.float32)
        scale = gamma / jnp.sqrt(run_var + eps)
        shift = beta - run_mean * scale
        return scale, shift

    w1, b1 = lin(ks[0], ks[1], cin, hidden)
    s1, t1 = bn(ks[2], ks[3], hidden)
    w2, b2 = lin(ks[4], ks[5], hidden, hidden)
    s2, t2 = bn(ks[6], ks[7], hidden)
    return dict(w1=w1, b1=b1, s1=s1, t1=t1, w2=w2, b2=b2, s2=s2, t2=t2)


# ----------------------------------------------------------------------------- main
if __name__ == "__main__":
    key = jax.random.PRNGKey(0)
    k_pos, k_x, k_par = jax.random.split(key, 3)

    # Two batches of 32 points each, 4 input features per point.
    seg_counts = (32, 32)
    N = sum(seg_counts)
    C, H = 4, 32
    ratio, r = 0.5, 0.75
    max_neighbors = 64

    pos = jax.random.uniform(k_pos, (N, 3), jnp.float32)
    x = jax.random.normal(k_x, (N, C), jnp.float32)
    batch = jnp.concatenate([jnp.full((n,), b, jnp.int32) for b, n in enumerate(seg_counts)])

    params = init_params(k_par, cin=C + 3, hidden=H)

    x_out, pos_out, batch_out = sa_module_forward(
        params, x, pos, batch, seg_counts,
        ratio=ratio, r=r, max_neighbors=max_neighbors)

    jax.block_until_ready((x_out, pos_out, batch_out))
    assert x_out.shape == (32, H) and pos_out.shape == (32, 3) and batch_out.shape == (32,)
    assert bool(jnp.all(jnp.isfinite(x_out)))

    # Numerics check of the Pallas MLP+max kernel against an unfused f32 reference
    # (loose tolerance: feat / weights are fed to the MXU in bf16).
    feat_t = jax.random.normal(jax.random.PRNGKey(1), (40, 64, C + 3), jnp.float32)
    ref = pointnet_conv_ref(feat_t, params)
    got = pointnet_conv(feat_t, params, tm=128)
    jax.block_until_ready(got)
    err = float(jnp.max(jnp.abs(got - ref)))
    assert err < 0.1, f"kernel vs reference mismatch: max abs err = {err}"

    print("KERNEL_OK")
</pallas_src>

<mosaic_0001>
module attributes {stable_mosaic.version = 11 : i64} {
  func.func @_pointnet_conv_kernel(%arg0: i32, %arg1: memref<64x128xbf16, #tpu.memory_space<vmem>>, %arg2: memref<128x512xbf16, #tpu.memory_space<vmem>>, %arg3: memref<1x512xf32, #tpu.memory_space<vmem>>, %arg4: memref<512x512xbf16, #tpu.memory_space<vmem>>, %arg5: memref<1x512xf32, #tpu.memory_space<vmem>>, %arg6: memref<1x512xf32, #tpu.memory_space<vmem>>, %arg7: memref<1x512xf32, #tpu.memory_space<vmem>>, %arg8: memref<16x128xf32, #tpu.memory_space<vmem>>) attributes {dimension_semantics = [#tpu.dimension_semantics<parallel>], iteration_bounds = array<i64: 2>, scalar_prefetch = 0 : i64, scratch_operands = 0 : i64, tpu.core_type = #tpu.core_type<tc>, window_params = [{transform_indices = @transform_0, window_bounds = array<i64: 64, 128>}, {pipeline_mode = #tpu.pipeline_mode<synchronous>, transform_indices = @transform_1, window_bounds = array<i64: 128, 512>}, {pipeline_mode = #tpu.pipeline_mode<synchronous>, transform_indices = @transform_2, window_bounds = array<i64: 1, 512>}, {pipeline_mode = #tpu.pipeline_mode<synchronous>, transform_indices = @transform_3, window_bounds = array<i64: 512, 512>}, {pipeline_mode = #tpu.pipeline_mode<synchronous>, transform_indices = @transform_4, window_bounds = array<i64: 1, 512>}, {pipeline_mode = #tpu.pipeline_mode<synchronous>, transform_indices = @transform_5, window_bounds = array<i64: 1, 512>}, {pipeline_mode = #tpu.pipeline_mode<synchronous>, transform_indices = @transform_6, window_bounds = array<i64: 1, 512>}, {transform_indices = @transform_7, window_bounds = array<i64: 16, 128>}]} {
    %c0 = arith.constant 0 : index
    %c0_0 = arith.constant 0 : index
    %0 = vector.load %arg1[%c0, %c0_0] : memref<64x128xbf16, #tpu.memory_space<vmem>>, vector<64x128xbf16>
    %c0_1 = arith.constant 0 : index
    %c0_2 = arith.constant 0 : index
    %1 = vector.load %arg2[%c0_1, %c0_2] : memref<128x512xbf16, #tpu.memory_space<vmem>>, vector<128x512xbf16>
    %cst = arith.constant dense<0.000000e+00> : vector<64x512xf32>
    %2 = tpu.matmul %0, %1, %cst {dimension_numbers = #tpu.dot_dimension_numbers<[1], [0], [0], [1], [0, 0, 1, 1], [], []>} : vector<64x128xbf16>, vector<128x512xbf16>, vector<64x512xf32> -> vector<64x512xf32>
    %c0_3 = arith.constant 0 : index
    %c0_4 = arith.constant 0 : index
    %3 = vector.load %arg3[%c0_3, %c0_4] : memref<1x512xf32, #tpu.memory_space<vmem>>, vector<1x512xf32>
    %4 = vector.broadcast %3 : vector<1x512xf32> to vector<64x512xf32>
    %5 = arith.addf %2, %4 : vector<64x512xf32>
    %cst_5 = arith.constant 0.000000e+00 : f32
    %6 = vector.broadcast %cst_5 : f32 to vector<64x512xf32>
    %7 = arith.maximumf %5, %6 : vector<64x512xf32>
    %8 = arith.truncf %7 : vector<64x512xf32> to vector<64x512xbf16>
    %c0_6 = arith.constant 0 : index
    %c0_7 = arith.constant 0 : index
    %9 = vector.load %arg4[%c0_6, %c0_7] : memref<512x512xbf16, #tpu.memory_space<vmem>>, vector<512x512xbf16>
    %cst_8 = arith.constant dense<0.000000e+00> : vector<64x512xf32>
    %10 = tpu.matmul %8, %9, %cst_8 {dimension_numbers = #tpu.dot_dimension_numbers<[1], [0], [0], [1], [0, 0, 1, 1], [], []>} : vector<64x512xbf16>, vector<512x512xbf16>, vector<64x512xf32> -> vector<64x512xf32>
    %c0_9 = arith.constant 0 : index
    %c0_10 = arith.constant 0 : index
    %11 = vector.load %arg5[%c0_9, %c0_10] : memref<1x512xf32, #tpu.memory_space<vmem>>, vector<1x512xf32>
    %12 = vector.broadcast %11 : vector<1x512xf32> to vector<64x512xf32>
    %13 = arith.addf %10, %12 : vector<64x512xf32>
    %cst_11 = arith.constant 0.000000e+00 : f32
    %14 = vector.broadcast %cst_11 : f32 to vector<64x512xf32>
    %15 = arith.maximumf %13, %14 : vector<64x512xf32>
    %c0_12 = arith.constant 0 : index
    %c0_13 = arith.constant 0 : index
    %16 = vector.load %arg6[%c0_12, %c0_13] : memref<1x512xf32, #tpu.memory_space<vmem>>, vector<1x512xf32>
    %17 = vector.broadcast %16 : vector<1x512xf32> to vector<64x512xf32>
    %18 = arith.mulf %15, %17 : vector<64x512xf32>
    %c0_14 = arith.constant 0 : index
    %c0_15 = arith.constant 0 : index
    %19 = vector.load %arg7[%c0_14, %c0_15] : memref<1x512xf32, #tpu.memory_space<vmem>>, vector<1x512xf32>
    %20 = vector.broadcast %19 : vector<1x512xf32> to vector<64x512xf32>
    %21 = arith.addf %18, %20 : vector<64x512xf32>
    %22 = vector.extract_strided_slice %21 {offsets = [0, 0], sizes = [64, 256], strides = [1, 1]} : vector<64x512xf32> to vector<64x256xf32>
    %23 = vector.extract_strided_slice %21 {offsets = [0, 256], sizes = [64, 256], strides = [1, 1]} : vector<64x512xf32> to vector<64x256xf32>
    %24 = arith.maximumf %22, %23 : vector<64x256xf32>
    %25 = vector.extract_strided_slice %24 {offsets = [0, 0], sizes = [64, 128], strides = [1, 1]} : vector<64x256xf32> to vector<64x128xf32>
    %26 = vector.extract_strided_slice %24 {offsets = [0, 128], sizes = [64, 128], strides = [1, 1]} : vector<64x256xf32> to vector<64x128xf32>
    %27 = arith.maximumf %25, %26 : vector<64x128xf32>
    %c64_i32 = arith.constant 64 : i32
    %28 = tpu.dynamic_rotate %27 by %c64_i32 dim 1 : vector<64x128xf32>, i32 -> vector<64x128xf32>
    %29 = arith.maximumf %27, %28 : vector<64x128xf32>
    %c32_i32 = arith.constant 32 : i32
    %30 = tpu.dynamic_rotate %29 by %c32_i32 dim 1 : vector<64x128xf32>, i32 -> vector<64x128xf32>
    %31 = arith.maximumf %29, %30 : vector<64x128xf32>
    %32 = vector.shape_cast %31 : vector<64x128xf32> to vector<16x4x128xf32>
    %cst_16 = arith.constant dense<0xFF800000> : vector<16x128xf32>
    %33 = vector.multi_reduction <maximumf>, %32, %cst_16 [1] : vector<16x4x128xf32> to vector<16x128xf32>
    %c0_17 = arith.constant 0 : index
    %c0_18 = arith.constant 0 : index
    %34 = vector.load %arg8[%c0_17, %c0_18] : memref<16x128xf32, #tpu.memory_space<vmem>>, vector<16x128xf32>
    tpu.vector_store %arg8[%c0_17, %c0_18], %33 {strides = array<i32>} : memref<16x128xf32, #tpu.memory_space<vmem>>, vector<16x128xf32>,
    return
  }
  func.func @transform_0(%arg0: i32) -> (i32, i32) {
    %c0_i32 = arith.constant 0 : i32
    %c0_i32_0 = arith.constant 0 : i32
    return %arg0, %c0_i32 : i32, i32
  }
  func.func @transform_1(%arg0: i32) -> (i32, i32) {
    %c0_i32 = arith.constant 0 : i32
    %c0_i32_0 = arith.constant 0 : i32
    %c0_i32_1 = arith.constant 0 : i32
    return %c0_i32, %c0_i32_0 : i32, i32
  }
  func.func @transform_2(%arg0: i32) -> (i32, i32) {
    %c0_i32 = arith.constant 0 : i32
    %c0_i32_0 = arith.constant 0 : i32
    %c0_i32_1 = arith.constant 0 : i32
    return %c0_i32, %c0_i32_0 : i32, i32
  }
  func.func @transform_3(%arg0: i32) -> (i32, i32) {
    %c0_i32 = arith.constant 0 : i32
    %c0_i32_0 = arith.constant 0 : i32
    %c0_i32_1 = arith.constant 0 : i32
    return %c0_i32, %c0_i32_0 : i32, i32
  }
  func.func @transform_4(%arg0: i32) -> (i32, i32) {
    %c0_i32 = arith.constant 0 : i32
    %c0_i32_0 = arith.constant 0 : i32
    %c0_i32_1 = arith.constant 0 : i32
    return %c0_i32, %c0_i32_0 : i32, i32
  }
  func.func @transform_5(%arg0: i32) -> (i32, i32) {
    %c0_i32 = arith.constant 0 : i32
    %c0_i32_0 = arith.constant 0 : i32
    %c0_i32_1 = arith.constant 0 : i32
    return %c0_i32, %c0_i32_0 : i32, i32
  }
  func.func @transform_6(%arg0: i32) -> (i32, i32) {
    %c0_i32 = arith.constant 0 : i32
    %c0_i32_0 = arith.constant 0 : i32
    %c0_i32_1 = arith.constant 0 : i32
    return %c0_i32, %c0_i32_0 : i32, i32
  }
  func.func @transform_7(%arg0: i32) -> (i32, i32) {
    %c0_i32 = arith.constant 0 : i32
    %c0_i32_0 = arith.constant 0 : i32
    return %arg0, %c0_i32 : i32, i32
  }
}

</mosaic_0001>

<llo_original>
// kernel: tpu_custom_call.1
$region0: #{tpu_custom_call.1}
  #allocation0 [shape = 'u32[]', space=smem, size = 0x4, offset = 0x4, fixed_abs, tag = 'smem constant byte address 0x4 - core index']
  #allocation1 [shape = 'u32[144,128]{1,0:T(1,128)}', space=vmem, size = 0x12000, scoped, tag = 'internal scratch']
  %s0 = inlined_call_operand.hbm [shape: bf16[128,128], index: 0, kind: input, shape index: {}]
  %s1 = inlined_call_operand.hbm [shape: bf16[128,512], index: 1, kind: input, shape index: {}]
  %s2 = inlined_call_operand.vmem [shape: f32[1,512], index: 2, kind: input, shape index: {}]
  %s3 = inlined_call_operand.hbm [shape: bf16[512,512], index: 3, kind: input, shape index: {}]
  %s4 = inlined_call_operand.vmem [shape: f32[1,512], index: 4, kind: input, shape index: {}]
  %s5 = inlined_call_operand.vmem [shape: f32[1,512], index: 5, kind: input, shape index: {}]
  %s6 = inlined_call_operand.vmem [shape: f32[1,512], index: 6, kind: input, shape index: {}]
  %s7 = inlined_call_operand.hbm [shape: f32[32,128], index: 7, kind: output, shape index: {}]
  %s8 = sld [smem:[#allocation0]]
  $region73: #{tpu_custom_call.1} parent=0
    _
  %s10 = ssub.s32 1, %s8
  %s11 = scalar_select 0, %s10, %s8
  $region1: #{tpu_custom_call.1} parent=0
    #allocation2 [shape = 'u8[32768]{0}', space=vmem, size = 0x8000, scoped, tag = 'input window, operand 0']
    #allocation3 [shape = 's32[2]{0}', space=sflag, size = 0x8, scoped, tag = 'scoped memory for tpu_custom_call.1']
    #allocation4 [shape = 's32[2]{0}', space=sflag, size = 0x8, scoped, tag = 'scoped memory for tpu_custom_call.1']
    #allocation5 [shape = 'u8[131072]{0}', space=vmem, size = 0x20000, scoped, tag = 'input window, operand 1, single buffered']
    #allocation6 [shape = 's32[1]{0}', space=sflag, size = 0x4, scoped, tag = 'scoped memory for tpu_custom_call.1']
    #allocation7 [shape = 'u8[524288]{0}', space=vmem, size = 0x80000, scoped, tag = 'input window, operand 3, single buffered']
    #allocation8 [shape = 'u8[16384]{0}', space=vmem, size = 0x4000, scoped, tag = 'output window, operand 0']
    %12 = vsyncpa [#allocation3], 0
    %s13 = scalar_lea.sflag [#allocation3], 1
    %14 = vsyncpa %s13, 0
    %15 = vsyncpa [#allocation6], 0
    %16 = vsyncpa [#allocation4], 0
    %s17 = scalar_lea.sflag [#allocation4], 1
    %18 = vsyncpa %s17, 0
    loop: start=0, step=1, limit=4
    $region2: #{tpu_custom_call.1} parent=1 // loop_pre_header
      _
    $region3: #{tpu_custom_call.1} parent=1 // loop_header
      %s20 = sphi 0, %s24
      %p21 = scmp.ge.s32.totalorder %s20, 4
      %s30 = sphi 0, %s32
      %s33 = sphi 0, %s30
      %s34 = sphi 0, %s33
      %s50 = sphi 0, %s34
      %s54 = sphi 0, %s54
      %s56 = sphi 0, %s54
      %s57 = sphi 0, %s56
      %s71 = sphi 0, %s57
      %s75 = sphi 0, %s75
      %s77 = sphi 0, %s75
      %s78 = sphi 0, %s77
      %s92 = sphi 0, %s78
      %s96 = sphi 0, %s96
      %s98 = sphi 0, %s96
      %s99 = sphi 0, %s98
      %s113 = sphi 0, %s99
      %s117 = sphi 0, %s117
      %s119 = sphi 0, %s117
      %s120 = sphi 0, %s119
      %s134 = sphi 0, %s120
      %s138 = sphi 0, %s138
      %s140 = sphi 0, %s138
      %s141 = sphi 0, %s140
      %s155 = sphi 0, %s141
      %s159 = sphi 0, %s159
      %s161 = sphi 0, %s159
      %s162 = sphi 0, %s161
      %s176 = sphi 0, %s162
      %s182 = sphi 0, %s184
      %s185 = sphi 0, %s182
      %s186 = sphi 0, %s185
      %s202 = sphi 0, %s186
    $region4: #{tpu_custom_call.1} parent=1 // loop_header_branch
      %23 = sbr.rel (%p21) target = $region8
    $region5: #{tpu_custom_call.1} parent=1 // loop_body
      %s25 = ssub.s32 %s20, 1
      %s26 = ssub.s32 %s20, 2
      %s27 = sadd.s32 %s20, 1
      %s28 = ssub.s32 %s20, %s27
      %p29 = scmp.eq.s32.totalorder %s28, 0
      %s31 = sadd.s32 %s30, 1
      %s32 = scalar_select %p29, %s30, %s31
      %p35 = pneg %p29
      %p36 = scmp.eq.s32.totalorder %s20, 1
      %p37 = por %p35, %p36
      %p38 = scmp.ne.s32.totalorder %s30, %s33
      %p39 = scmp.eq.s32.totalorder %s20, 0
      %p40 = por %p38, %p39
      %p41 = scmp.ne.s32.totalorder %s30, %s33
      %p42 = scmp.eq.s32.totalorder %s25, 1
      %p43 = por %p41, %p42
      %p44 = scmp.ne.s32.totalorder %s33, %s34
      %p45 = scmp.eq.s32.totalorder %s25, 0
      %p46 = por %p44, %p45
      %p47 = scmp.ne.s32.totalorder %s33, %s34
      %p48 = scmp.eq.s32.totalorder %s26, 1
      %p49 = por %p47, %p48
      %p51 = scmp.ne.s32.totalorder %s34, %s50
      %p52 = scmp.eq.s32.totalorder %s26, 0
      %p53 = por %p51, %p52
      %s55 = sadd.s32 %s54, 1
      %p58 = scmp.eq.s32.totalorder %s20, 1
      %p59 = scmp.ne.s32.totalorder %s54, %s56
      %p60 = scmp.eq.s32.totalorder %s20, 0
      %p61 = por %p59, %p60
      %p62 = scmp.ne.s32.totalorder %s54, %s56
      %p63 = scmp.eq.s32.totalorder %s25, 1
      %p64 = por %p62, %p63
      %p65 = scmp.ne.s32.totalorder %s56, %s57
      %p66 = scmp.eq.s32.totalorder %s25, 0
      %p67 = por %p65, %p66
      %p68 = scmp.ne.s32.totalorder %s56, %s57
      %p69 = scmp.eq.s32.totalorder %s26, 1
      %p70 = por %p68, %p69
      %p72 = scmp.ne.s32.totalorder %s57, %s71
      %p73 = scmp.eq.s32.totalorder %s26, 0
      %p74 = por %p72, %p73
      %s76 = sadd.s32 %s75, 1
      %p79 = scmp.eq.s32.totalorder %s20, 1
      %p80 = scmp.ne.s32.totalorder %s75, %s77
      %p81 = scmp.eq.s32.totalorder %s20, 0
      %p82 = por %p80, %p81
      %p83 = scmp.ne.s32.totalorder %s75, %s77
      %p84 = scmp.eq.s32.totalorder %s25, 1
      %p85 = por %p83, %p84
      %p86 = scmp.ne.s32.totalorder %s77, %s78
      %p87 = scmp.eq.s32.totalorder %s25, 0
      %p88 = por %p86, %p87
      %p89 = scmp.ne.s32.totalorder %s77, %s78
      %p90 = scmp.eq.s32.totalorder %s26, 1
      %p91 = por %p89, %p90
      %p93 = scmp.ne.s32.totalorder %s78, %s92
      %p94 = scmp.eq.s32.totalorder %s26, 0
      %p95 = por %p93, %p94
      %s97 = sadd.s32 %s96, 1
      %p100 = scmp.eq.s32.totalorder %s20, 1
      %p101 = scmp.ne.s32.totalorder %s96, %s98
      %p102 = scmp.eq.s32.totalorder %s20, 0
      %p103 = por %p101, %p102
      %p104 = scmp.ne.s32.totalorder %s96, %s98
      %p105 = scmp.eq.s32.totalorder %s25, 1
      %p106 = por %p104, %p105
      %p107 = scmp.ne.s32.totalorder %s98, %s99
      %p108 = scmp.eq.s32.totalorder %s25, 0
      %p109 = por %p107, %p108
      %p110 = scmp.ne.s32.totalorder %s98, %s99
      %p111 = scmp.eq.s32.totalorder %s26, 1
      %p112 = por %p110, %p111
      %p114 = scmp.ne.s32.totalorder %s99, %s113
      %p115 = scmp.eq.s32.totalorder %s26, 0
      %p116 = por %p114, %p115
      %s118 = sadd.s32 %s117, 1
      %p121 = scmp.eq.s32.totalorder %s20, 1
      %p122 = scmp.ne.s32.totalorder %s117, %s119
      %p123 = scmp.eq.s32.totalorder %s20, 0
      %p124 = por %p122, %p123
      %p125 = scmp.ne.s32.totalorder %s117, %s119
      %p126 = scmp.eq.s32.totalorder %s25, 1
      %p127 = por %p125, %p126
      %p128 = scmp.ne.s32.totalorder %s119, %s120
      %p129 = scmp.eq.s32.totalorder %s25, 0
      %p130 = por %p128, %p129
      %p131 = scmp.ne.s32.totalorder %s119, %s120
      %p132 = scmp.eq.s32.totalorder %s26, 1
      %p133 = por %p131, %p132
      %p135 = scmp.ne.s32.totalorder %s120, %s134
      %p136 = scmp.eq.s32.totalorder %s26, 0
      %p137 = por %p135, %p136
      %s139 = sadd.s32 %s138, 1
      %p142 = scmp.eq.s32.totalorder %s20, 1
      %p143 = scmp.ne.s32.totalorder %s138, %s140
      %p144 = scmp.eq.s32.totalorder %s20, 0
      %p145 = por %p143, %p144
      %p146 = scmp.ne.s32.totalorder %s138, %s140
      %p147 = scmp.eq.s32.totalorder %s25, 1
      %p148 = por %p146, %p147
      %p149 = scmp.ne.s32.totalorder %s140, %s141
      %p150 = scmp.eq.s32.totalorder %s25, 0
      %p151 = por %p149, %p150
      %p152 = scmp.ne.s32.totalorder %s140, %s141
      %p153 = scmp.eq.s32.totalorder %s26, 1
      %p154 = por %p152, %p153
      %p156 = scmp.ne.s32.totalorder %s141, %s155
      %p157 = scmp.eq.s32.totalorder %s26, 0
      %p158 = por %p156, %p157
      %s160 = sadd.s32 %s159, 1
      %p163 = scmp.eq.s32.totalorder %s20, 1
      %p164 = scmp.ne.s32.totalorder %s159, %s161
      %p165 = scmp.eq.s32.totalorder %s20, 0
      %p166 = por %p164, %p165
      %p167 = scmp.ne.s32.totalorder %s159, %s161
      %p168 = scmp.eq.s32.totalorder %s25, 1
      %p169 = por %p167, %p168
      %p170 = scmp.ne.s32.totalorder %s161, %s162
      %p171 = scmp.eq.s32.totalorder %s25, 0
      %p172 = por %p170, %p171
      %p173 = scmp.ne.s32.totalorder %s161, %s162
      %p174 = scmp.eq.s32.totalorder %s26, 1
      %p175 = por %p173, %p174
      %p177 = scmp.ne.s32.totalorder %s162, %s176
      %p178 = scmp.eq.s32.totalorder %s26, 0
      %p179 = por %p177, %p178
      %s180 = ssub.s32 %s20, %s27
      %p181 = scmp.eq.s32.totalorder %s180, 0
      %s183 = sadd.s32 %s182, 1
      %s184 = scalar_select %p181, %s182, %s183
      %p187 = pneg %p181
      %p188 = scmp.eq.s32.totalorder %s20, 1
      %p189 = por %p187, %p188
      %p190 = scmp.ne.s32.totalorder %s182, %s185
      %p191 = scmp.eq.s32.totalorder %s20, 0
      %p192 = por %p190, %p191
      %p193 = scmp.ne.s32.totalorder %s182, %s185
      %p194 = scmp.eq.s32.totalorder %s25, 1
      %p195 = por %p193, %p194
      %p196 = scmp.ne.s32.totalorder %s185, %s186
      %p197 = scmp.eq.s32.totalorder %s25, 0
      %p198 = por %p196, %p197
      %p199 = scmp.ne.s32.totalorder %s185, %s186
      %p200 = scmp.eq.s32.totalorder %s26, 1
      %p201 = por %p199, %p200
      %p203 = scmp.ne.s32.totalorder %s186, %s202
      %p204 = scmp.eq.s32.totalorder %s26, 0
      %p205 = por %p203, %p204
      %p206 = scmp.le.s32.totalorder 1, %s20
      %p207 = scmp.lt.s32.totalorder %s20, 3
      %p208 = pnand %p206, %p207
      %p209 = pneg %p208
      // Predicated region
      $region9: #{tpu_custom_call.1} parent=5 // pred_check
        _
      $region10: #{tpu_custom_call.1} parent=5 // pred_check_branch
        %211 = sbr.rel (%p208) target = $region12
      $region11: #{tpu_custom_call.1} parent=5 // pred_region
        %s212 = ssub.s32 %s20, 1
        // Predicated region
        $region13: #{tpu_custom_call.1} parent=11 // pred_check
          %p213 = pneg %p67
        $region14: #{tpu_custom_call.1} parent=11 // pred_check_branch
          %215 = sbr.rel (%p213) target = $region16
        $region15: #{tpu_custom_call.1} parent=11 // pred_region
          %s217 = ssub.s32 4096, 4096
          %218 = vsyncadd [#allocation6], %s217
          %s219 = sshll.u32 [#allocation5], 4
          %s220 = int_to_ptr.vmem [resolvable:$true] %s219
          %225 = dma.hbm_to_vmem [thread:$0]  %s1, 4096, %s220, [#allocation6], 256, 256, 16
        $region16: #{tpu_custom_call.1} parent=11 // pred_fallthru
          _
        // Predicated region
        $region17: #{tpu_custom_call.1} parent=11 // pred_check
          %p226 = pneg %p88
        $region18: #{tpu_custom_call.1} parent=11 // pred_check_branch
          %228 = sbr.rel (%p226) target = $region20
        $region19: #{tpu_custom_call.1} parent=11 // pred_region
          _
        $region20: #{tpu_custom_call.1} parent=11 // pred_fallthru
          _
        // Predicated region
        $region21: #{tpu_custom_call.1} parent=11 // pred_check
          %p229 = pneg %p109
        $region22: #{tpu_custom_call.1} parent=11 // pred_check_branch
          %231 = sbr.rel (%p229) target = $region24
        $region23: #{tpu_custom_call.1} parent=11 // pred_region
          %s233 = ssub.s32 16384, 16384
          %234 = vsyncadd [#allocation6], %s233
          %s235 = sshll.u32 [#allocation7], 4
          %s236 = int_to_ptr.vmem [resolvable:$true] %s235
          %241 = dma.hbm_to_vmem [thread:$0]  %s3, 16384, %s236, [#allocation6], 256, 256, 16
        $region24: #{tpu_custom_call.1} parent=11 // pred_fallthru
          _
        // Predicated region
        $region25: #{tpu_custom_call.1} parent=11 // pred_check
          %p242 = pneg %p130
        $region26: #{tpu_custom_call.1} parent=11 // pred_check_branch
          %244 = sbr.rel (%p242) target = $region28
        $region27: #{tpu_custom_call.1} parent=11 // pred_region
          _
        $region28: #{tpu_custom_call.1} parent=11 // pred_fallthru
          _
        // Predicated region
        $region29: #{tpu_custom_call.1} parent=11 // pred_check
          %p245 = pneg %p151
        $region30: #{tpu_custom_call.1} parent=11 // pred_check_branch
          %247 = sbr.rel (%p245) target = $region32
        $region31: #{tpu_custom_call.1} parent=11 // pred_region
          _
        $region32: #{tpu_custom_call.1} parent=11 // pred_fallthru
          _
        // Predicated region
        $region33: #{tpu_custom_call.1} parent=11 // pred_check
          %p248 = pneg %p172
        $region34: #{tpu_custom_call.1} parent=11 // pred_check_branch
          %250 = sbr.rel (%p248) target = $region36
        $region35: #{tpu_custom_call.1} parent=11 // pred_region
          _
        $region36: #{tpu_custom_call.1} parent=11 // pred_fallthru
          _
      $region12: #{tpu_custom_call.1} parent=5 // pred_fallthru
        _
      %p251 = scmp.lt.s32.totalorder %s20, 2
      // Predicated region
      $region37: #{tpu_custom_call.1} parent=5 // pred_check
        %p252 = pneg %p251
      $region38: #{tpu_custom_call.1} parent=5 // pred_check_branch
        %254 = sbr.rel (%p252) target = $region40
      $region39: #{tpu_custom_call.1} parent=5 // pred_region
        // Predicated region
        $region41: #{tpu_custom_call.1} parent=39 // pred_check
          %p255 = pneg %p40
        $region42: #{tpu_custom_call.1} parent=39 // pred_check_branch
          %257 = sbr.rel (%p255) target = $region44
        $region43: #{tpu_custom_call.1} parent=39 // pred_region
          %s258 = sand.u32 %s30, 1
          %s259 = scalar_lea.sflag [#allocation3], %s258
          %s260 = sand.u32 %s30, 1
          %s261 = smul.addr %s260, 32
          %s262 = scalar_lea.vmem [#allocation2], %s261
          %s263 = smul.u32 8, %s20
          %s265 = ssub.s32 512, 512
          %266 = vsyncadd %s259, %s265
          %s267 = smul.addr %s263, 64
          %s268 = scalar_lea.hbm %s0, %s267
          %s269 = sshll.u32 %s262, 4
          %s270 = int_to_ptr.vmem [resolvable:$true] %s269
          %275 = dma.hbm_to_vmem [thread:$0]  %s268, 512, %s270, %s259, 64, 64, 4
        $region44: #{tpu_custom_call.1} parent=39 // pred_fallthru
          _
      $region40: #{tpu_custom_call.1} parent=5 // pred_fallthru
        _
      %p276 = scmp.le.s32.totalorder 1, %s20
      %p277 = scmp.lt.s32.totalorder %s20, 3
      %p278 = pnand %p276, %p277
      %p279 = pneg %p278
      // Predicated region
      $region45: #{tpu_custom_call.1} parent=5 // pred_check
        _
      $region46: #{tpu_custom_call.1} parent=5 // pred_check_branch
        %281 = sbr.rel (%p278) target = $region48
      $region47: #{tpu_custom_call.1} parent=5 // pred_region
        %s282 = ssub.s32 %s20, 1
        %s283 = sand.u32 %s33, 1
        %s284 = scalar_lea.sflag [#allocation3], %s283
        %s285 = sand.u32 %s33, 1
        %s286 = smul.addr %s285, 32
        %s287 = scalar_lea.vmem [#allocation2], %s286
        // Predicated region
        $region49: #{tpu_custom_call.1} parent=47 // pred_check
          %p288 = pneg %p46
        $region50: #{tpu_custom_call.1} parent=47 // pred_check_branch
          %290 = sbr.rel (%p288) target = $region52
        $region51: #{tpu_custom_call.1} parent=47 // pred_region
          %291 = dma.done %s284, 512
        $region52: #{tpu_custom_call.1} parent=47 // pred_fallthru
          _
        // Predicated region
        $region53: #{tpu_custom_call.1} parent=47 // pred_check
          %p292 = pneg %p67
        $region54: #{tpu_custom_call.1} parent=47 // pred_check_branch
          %294 = sbr.rel (%p292) target = $region56
        $region55: #{tpu_custom_call.1} parent=47 // pred_region
          %295 = dma.done [#allocation6], 4096
        $region56: #{tpu_custom_call.1} parent=47 // pred_fallthru
          _
        // Predicated region
        $region57: #{tpu_custom_call.1} parent=47 // pred_check
          %p296 = pneg %p109
        $region58: #{tpu_custom_call.1} parent=47 // pred_check_branch
          %298 = sbr.rel (%p296) target = $region60
        $region59: #{tpu_custom_call.1} parent=47 // pred_region
          %299 = dma.done [#allocation6], 16384
        $region60: #{tpu_custom_call.1} parent=47 // pred_fallthru
          _
        %s300 = sand.u32 %s33, 1
        %s301 = scalar_lea.sflag [#allocation3], %s300
        %s302 = sand.u32 %s33, 1
        %s303 = smul.addr %s302, 32
        %s304 = scalar_lea.vmem [#allocation2], %s303
        %p305 = pneg %p46
        %p306 = pneg %p43
        %p307 = pneg %p67
        %p308 = pneg %p64
        %p309 = pneg %p88
        %p310 = pneg %p85
        %p311 = pneg %p109
        %p312 = pneg %p106
        %p313 = pneg %p130
        %p314 = pneg %p127
        %p315 = pneg %p151
        %p316 = pneg %p148
        %p317 = pneg %p172
        %p318 = pneg %p169
        %p319 = pneg %p198
        %p320 = pneg %p195
        %s321 = sand.u32 %s185, 1
        %s322 = scalar_lea.sflag [#allocation4], %s321
        %s323 = sand.u32 %s185, 1
        %s324 = smul.addr %s323, 16
        %s325 = scalar_lea.vmem [#allocation8], %s324
        %s326 = smul.u32 8, %s25
        %s327 = smul.u32 2, %s25
        %v329 = vld [vmem:[%s287] sm:$0xf]
        %v330 = vld [vmem:[%s287 + $0x4] sm:$0xf]
        %v331 = vld [vmem:[%s287 + $0x8] sm:$0xf]
        %v332 = vld [vmem:[%s287 + $0xc] sm:$0xf]
        %v333 = vld [vmem:[%s287 + $0x10] sm:$0xf]
        %v334 = vld [vmem:[%s287 + $0x14] sm:$0xf]
        %v335 = vld [vmem:[%s287 + $0x18] sm:$0xf]
        %v336 = vld [vmem:[%s287 + $0x1c] sm:$0xf]
        %v337 = vld [vmem:[#allocation5] sm:$0xff]
        %v338 = vld [vmem:[#allocation5 + $0x8] sm:$0xff]
        %v339 = vld [vmem:[#allocation5 + $0x10] sm:$0xff]
        %v340 = vld [vmem:[#allocation5 + $0x18] sm:$0xff]
        %v341 = vld [vmem:[#allocation5 + $0x20] sm:$0xff]
        %v342 = vld [vmem:[#allocation5 + $0x28] sm:$0xff]
        %v343 = vld [vmem:[#allocation5 + $0x30] sm:$0xff]
        %v344 = vld [vmem:[#allocation5 + $0x38] sm:$0xff]
        %v345 = vld [vmem:[#allocation5 + $0x40] sm:$0xff]
        %v346 = vld [vmem:[#allocation5 + $0x48] sm:$0xff]
        %v347 = vld [vmem:[#allocation5 + $0x50] sm:$0xff]
        %v348 = vld [vmem:[#allocation5 + $0x58] sm:$0xff]
        %v349 = vld [vmem:[#allocation5 + $0x60] sm:$0xff]
        %v350 = vld [vmem:[#allocation5 + $0x68] sm:$0xff]
        %v351 = vld [vmem:[#allocation5 + $0x70] sm:$0xff]
        %v352 = vld [vmem:[#allocation5 + $0x78] sm:$0xff]
        %v353 = vld [vmem:[#allocation5 + $0x80] sm:$0xff]
        %v354 = vld [vmem:[#allocation5 + $0x88] sm:$0xff]
        %v355 = vld [vmem:[#allocation5 + $0x90] sm:$0xff]
        %v356 = vld [vmem:[#allocation5 + $0x98] sm:$0xff]
        %v357 = vld [vmem:[#allocation5 + $0xa0] sm:$0xff]
        %v358 = vld [vmem:[#allocation5 + $0xa8] sm:$0xff]
        %v359 = vld [vmem:[#allocation5 + $0xb0] sm:$0xff]
        %v360 = vld [vmem:[#allocation5 + $0xb8] sm:$0xff]
        %v361 = vld [vmem:[#allocation5 + $0xc0] sm:$0xff]
        %v362 = vld [vmem:[#allocation5 + $0xc8] sm:$0xff]
        %v363 = vld [vmem:[#allocation5 + $0xd0] sm:$0xff]
        %v364 = vld [vmem:[#allocation5 + $0xd8] sm:$0xff]
        %v365 = vld [vmem:[#allocation5 + $0xe0] sm:$0xff]
        %v366 = vld [vmem:[#allocation5 + $0xe8] sm:$0xff]
        %v367 = vld [vmem:[#allocation5 + $0xf0] sm:$0xff]
        %v368 = vld [vmem:[#allocation5 + $0xf8] sm:$0xff]
        %v369 = vld [vmem:[%s2] sm:$0xf]
        %v371 = vlaneseq
        %v372 = vshrl.u32 %v371, 7
        %v373 = vsub.s32 0, %v372
        %v374 = vrot.slane %v369, %v373
        %v375 = vlaneseq
        %v376 = vshrl.u32 %v375, 7
        %v377 = vsub.s32 1, %v376
        %v378 = vrot.slane %v369, %v377
        %v379 = vlaneseq
        %v380 = vshrl.u32 %v379, 7
        %v381 = vsub.s32 2, %v380
        %v382 = vrot.slane %v369, %v381
        %v383 = vlaneseq
        %v384 = vshrl.u32 %v383, 7
        %v385 = vsub.s32 3, %v384
        %v386 = vrot.slane %v369, %v385
        %v399 = vunpack.c.l.b16 %v329
        %v400 = vunpack.c.l.b16 %v330
        %v401 = vunpack.c.l.b16 %v331
        %v402 = vunpack.c.l.b16 %v332
        %v403 = vunpack.c.l.b16 %v333
        %v404 = vunpack.c.l.b16 %v334
        %v405 = vunpack.c.l.b16 %v335
        %v406 = vunpack.c.l.b16 %v336
        %v407 = vpack.c.b16 %v400, %v399
        %v408 = vpack.c.b16 %v402, %v401
        %v409 = vpack.c.b16 %v404, %v403
        %v410 = vpack.c.b16 %v406, %v405
        %v447 = vunpack.c.l.b16 %v337
        %v448 = vunpack.c.h.b16 %v337
        %v449 = vunpack.c.l.b16 %v338
        %v450 = vunpack.c.h.b16 %v338
        %v451 = vunpack.c.l.b16 %v339
        %v452 = vunpack.c.h.b16 %v339
        %v453 = vunpack.c.l.b16 %v340
        %v454 = vunpack.c.h.b16 %v340
        %v455 = vunpack.c.l.b16 %v341
        %v456 = vunpack.c.h.b16 %v341
        %v457 = vunpack.c.l.b16 %v342
        %v458 = vunpack.c.h.b16 %v342
        %v459 = vunpack.c.l.b16 %v343
        %v460 = vunpack.c.h.b16 %v343
        %v461 = vunpack.c.l.b16 %v344
        %v462 = vunpack.c.h.b16 %v344
        %v463 = vunpack.c.l.b16 %v345
        %v464 = vunpack.c.h.b16 %v345
        %v465 = vunpack.c.l.b16 %v346
        %v466 = vunpack.c.h.b16 %v346
        %v467 = vunpack.c.l.b16 %v347
        %v468 = vunpack.c.h.b16 %v347
        %v469 = vunpack.c.l.b16 %v348
        %v470 = vunpack.c.h.b16 %v348
        %v471 = vunpack.c.l.b16 %v349
        %v472 = vunpack.c.h.b16 %v349
        %v473 = vunpack.c.l.b16 %v350
        %v474 = vunpack.c.h.b16 %v350
        %v475 = vunpack.c.l.b16 %v351
        %v476 = vunpack.c.h.b16 %v351
        %v477 = vunpack.c.l.b16 %v352
        %v478 = vunpack.c.h.b16 %v352
        %v479 = vunpack.c.l.b16 %v353
        %v480 = vunpack.c.h.b16 %v353
        %v481 = vunpack.c.l.b16 %v354
        %v482 = vunpack.c.h.b16 %v354
        %v483 = vunpack.c.l.b16 %v355
        %v484 = vunpack.c.h.b16 %v355
        %v485 = vunpack.c.l.b16 %v356
        %v486 = vunpack.c.h.b16 %v356
        %v487 = vunpack.c.l.b16 %v357
        %v488 = vunpack.c.h.b16 %v357
        %v489 = vunpack.c.l.b16 %v358
        %v490 = vunpack.c.h.b16 %v358
        %v491 = vunpack.c.l.b16 %v359
        %v492 = vunpack.c.h.b16 %v359
        %v493 = vunpack.c.l.b16 %v360
        %v494 = vunpack.c.h.b16 %v360
        %v495 = vunpack.c.l.b16 %v361
        %v496 = vunpack.c.h.b16 %v361
        %v497 = vunpack.c.l.b16 %v362
        %v498 = vunpack.c.h.b16 %v362
        %v499 = vunpack.c.l.b16 %v363
        %v500 = vunpack.c.h.b16 %v363
        %v501 = vunpack.c.l.b16 %v364
        %v502 = vunpack.c.h.b16 %v364
        %v503 = vunpack.c.l.b16 %v365
        %v504 = vunpack.c.h.b16 %v365
        %v505 = vunpack.c.l.b16 %v366
        %v506 = vunpack.c.h.b16 %v366
        %v507 = vunpack.c.l.b16 %v367
        %v508 = vunpack.c.h.b16 %v367
        %v509 = vunpack.c.l.b16 %v368
        %v510 = vunpack.c.h.b16 %v368
        %v511 = vpack.c.b16 %v451, %v447
        %v512 = vpack.c.b16 %v452, %v448
        %v513 = vpack.c.b16 %v453, %v449
        %v514 = vpack.c.b16 %v454, %v450
        %v515 = vpack.c.b16 %v459, %v455
        %v516 = vpack.c.b16 %v460, %v456
        %v517 = vpack.c.b16 %v461, %v457
        %v518 = vpack.c.b16 %v462, %v458
        %v519 = vpack.c.b16 %v467, %v463
        %v520 = vpack.c.b16 %v468, %v464
        %v521 = vpack.c.b16 %v469, %v465
        %v522 = vpack.c.b16 %v470, %v466
        %v523 = vpack.c.b16 %v475, %v471
        %v524 = vpack.c.b16 %v476, %v472
        %v525 = vpack.c.b16 %v477, %v473
        %v526 = vpack.c.b16 %v478, %v474
        %v527 = vpack.c.b16 %v483, %v479
        %v528 = vpack.c.b16 %v484, %v480
        %v529 = vpack.c.b16 %v485, %v481
        %v530 = vpack.c.b16 %v486, %v482
        %v531 = vpack.c.b16 %v491, %v487
        %v532 = vpack.c.b16 %v492, %v488
        %v533 = vpack.c.b16 %v493, %v489
        %v534 = vpack.c.b16 %v494, %v490
        %v535 = vpack.c.b16 %v499, %v495
        %v536 = vpack.c.b16 %v500, %v496
        %v537 = vpack.c.b16 %v501, %v497
        %v538 = vpack.c.b16 %v502, %v498
        %v539 = vpack.c.b16 %v507, %v503
        %v540 = vpack.c.b16 %v508, %v504
        %v541 = vpack.c.b16 %v509, %v505
        %v542 = vpack.c.b16 %v510, %v506
        %575 = vmatprep.subr.bf16.mxu0 %v512
        %576 = vmatpush1.bf16.msra.mxu0 %v511
        %577 = vmatprep.subr.bf16.mxu0 %v516
        %578 = vmatpush1.bf16.msra.mxu0 %v515
        %579 = vmatprep.subr.bf16.mxu0 %v520
        %580 = vmatpush1.bf16.msra.mxu0 %v519
        %581 = vmatprep.subr.bf16.mxu0 %v524
        %582 = vmatpush1.bf16.msra.mxu0 %v523
        %583 = vmatprep.subr.bf16.mxu0 %v528
        %584 = vmatpush1.bf16.msra.mxu0 %v527
        %585 = vmatprep.subr.bf16.mxu0 %v532
        %586 = vmatpush1.bf16.msra.mxu0 %v531
        %587 = vmatprep.subr.bf16.mxu0 %v536
        %588 = vmatpush1.bf16.msra.mxu0 %v535
        %589 = vmatprep.subr.bf16.mxu0 %v540
        %590 = vmatpush1.bf16.msra.mxu0 %v539
        %591 = vmatprep.subr.bf16.mxu0 0
        %592 = vmatpush1.bf16.msra.mxu0 0
        %593 = vmatprep.subr.bf16.mxu0 0
        %594 = vmatpush1.bf16.msra.mxu0 0
        %595 = vmatprep.subr.bf16.mxu0 0
        %596 = vmatpush1.bf16.msra.mxu0 0
        %597 = vmatprep.subr.bf16.mxu0 0
        %598 = vmatpush1.bf16.msra.mxu0 0
        %599 = vmatprep.subr.bf16.mxu0 0
        %600 = vmatpush1.bf16.msra.mxu0 0
        %601 = vmatprep.subr.bf16.mxu0 0
        %602 = vmatpush1.bf16.msra.mxu0 0
        %603 = vmatprep.subr.bf16.mxu0 0
        %604 = vmatpush1.bf16.msra.mxu0 0
        %605 = vmatprep.subr.bf16.mxu0 0
        %606 = vmatpush1.bf16.msra.mxu0 0
        %607 = vmatprep.mubr.bf16.mxu0 0
        %608 = vmatmul.mubr.bf16.gmra.mrb[0].mxu0 %v407
        %v609 = vpop.f32.mrb[0].mxu0
        %v610 = vadd.f32 %v374, %v609
        %v611 = vpop.f32.mrb[0].mxu0
        %v612 = vadd.f32 %v378, %v611
        %v613 = vpop.f32.mrb[0].mxu0
        %v614 = vadd.f32 %v374, %v613
        %v615 = vpop.f32.mrb[0].mxu0
        %v616 = vadd.f32 %v378, %v615
        %617 = vmatprep.mubr.bf16.mxu0 0
        %618 = vmatmul.mubr.bf16.gmra.mrb[0].mxu0 %v408
        %v619 = vpop.f32.mrb[0].mxu0
        %v620 = vadd.f32 %v374, %v619
        %v621 = vpop.f32.mrb[0].mxu0
        %v622 = vadd.f32 %v378, %v621
        %v623 = vpop.f32.mrb[0].mxu0
        %v624 = vadd.f32 %v374, %v623
        %v625 = vpop.f32.mrb[0].mxu0
        %v626 = vadd.f32 %v378, %v625
        %627 = vmatprep.mubr.bf16.mxu0 0
        %628 = vmatmul.mubr.bf16.gmra.mrb[0].mxu0 %v409
        %v629 = vpop.f32.mrb[0].mxu0
        %v630 = vadd.f32 %v374, %v629
        %v631 = vpop.f32.mrb[0].mxu0
        %v632 = vadd.f32 %v378, %v631
        %v633 = vpop.f32.mrb[0].mxu0
        %v634 = vadd.f32 %v374, %v633
        %v635 = vpop.f32.mrb[0].mxu0
        %v636 = vadd.f32 %v378, %v635
        %637 = vmatprep.mubr.bf16.mxu0 0
        %638 = vmatmul.mubr.bf16.gmra.mrb[0].mxu0 %v410
        %v639 = vpop.f32.mrb[0].mxu0
        %v640 = vadd.f32 %v374, %v639
        %v641 = vpop.f32.mrb[0].mxu0
        %v642 = vadd.f32 %v378, %v641
        %v643 = vpop.f32.mrb[0].mxu0
        %v644 = vadd.f32 %v374, %v643
        %v645 = vpop.f32.mrb[0].mxu0
        %v646 = vadd.f32 %v378, %v645
        %647 = vdwg.mxu0
        %648 = vmatprep.subr.bf16.mxu0 %v514
        %649 = vmatpush1.bf16.msra.mxu0 %v513
        %650 = vmatprep.subr.bf16.mxu0 %v518
        %651 = vmatpush1.bf16.msra.mxu0 %v517
        %652 = vmatprep.subr.bf16.mxu0 %v522
        %653 = vmatpush1.bf16.msra.mxu0 %v521
        %654 = vmatprep.subr.bf16.mxu0 %v526
        %655 = vmatpush1.bf16.msra.mxu0 %v525
        %656 = vmatprep.subr.bf16.mxu0 %v530
        %657 = vmatpush1.bf16.msra.mxu0 %v529
        %658 = vmatprep.subr.bf16.mxu0 %v534
        %659 = vmatpush1.bf16.msra.mxu0 %v533
        %660 = vmatprep.subr.bf16.mxu0 %v538
        %661 = vmatpush1.bf16.msra.mxu0 %v537
        %662 = vmatprep.subr.bf16.mxu0 %v542
        %663 = vmatpush1.bf16.msra.mxu0 %v541
        %664 = vmatprep.subr.bf16.mxu0 0
        %665 = vmatpush1.bf16.msra.mxu0 0
        %666 = vmatprep.subr.bf16.mxu0 0
        %667 = vmatpush1.bf16.msra.mxu0 0
        %668 = vmatprep.subr.bf16.mxu0 0
        %669 = vmatpush1.bf16.msra.mxu0 0
        %670 = vmatprep.subr.bf16.mxu0 0
        %671 = vmatpush1.bf16.msra.mxu0 0
        %672 = vmatprep.subr.bf16.mxu0 0
        %673 = vmatpush1.bf16.msra.mxu0 0
        %674 = vmatprep.subr.bf16.mxu0 0
        %675 = vmatpush1.bf16.msra.mxu0 0
        %676 = vmatprep.subr.bf16.mxu0 0
        %677 = vmatpush1.bf16.msra.mxu0 0
        %678 = vmatprep.subr.bf16.mxu0 0
        %679 = vmatpush1.bf16.msra.mxu0 0
        %680 = vmatprep.mubr.bf16.mxu0 0
        %681 = vmatmul.mubr.bf16.gmra.mrb[0].mxu0 %v407
        %v682 = vpop.f32.mrb[0].mxu0
        %v683 = vadd.f32 %v382, %v682
        %v684 = vpop.f32.mrb[0].mxu0
        %v685 = vadd.f32 %v386, %v684
        %v686 = vpop.f32.mrb[0].mxu0
        %v687 = vadd.f32 %v382, %v686
        %v688 = vpop.f32.mrb[0].mxu0
        %v689 = vadd.f32 %v386, %v688
        %690 = vmatprep.mubr.bf16.mxu0 0
        %691 = vmatmul.mubr.bf16.gmra.mrb[0].mxu0 %v408
        %v692 = vpop.f32.mrb[0].mxu0
        %v693 = vadd.f32 %v382, %v692
        %v694 = vpop.f32.mrb[0].mxu0
        %v695 = vadd.f32 %v386, %v694
        %v696 = vpop.f32.mrb[0].mxu0
        %v697 = vadd.f32 %v382, %v696
        %v698 = vpop.f32.mrb[0].mxu0
        %v699 = vadd.f32 %v386, %v698
        %700 = vmatprep.mubr.bf16.mxu0 0
        %701 = vmatmul.mubr.bf16.gmra.mrb[0].mxu0 %v409
        %v702 = vpop.f32.mrb[0].mxu0
        %v703 = vadd.f32 %v382, %v702
        %v704 = vpop.f32.mrb[0].mxu0
        %v705 = vadd.f32 %v386, %v704
        %v706 = vpop.f32.mrb[0].mxu0
        %v707 = vadd.f32 %v382, %v706
        %v708 = vpop.f32.mrb[0].mxu0
        %v709 = vadd.f32 %v386, %v708
        %710 = vmatprep.mubr.bf16.mxu0 0
        %711 = vmatmul.mubr.bf16.gmra.mrb[0].mxu0 %v410
        %v712 = vpop.f32.mrb[0].mxu0
        %v713 = vadd.f32 %v382, %v712
        %v714 = vpop.f32.mrb[0].mxu0
        %v715 = vadd.f32 %v386, %v714
        %v716 = vpop.f32.mrb[0].mxu0
        %v717 = vadd.f32 %v382, %v716
        %v718 = vpop.f32.mrb[0].mxu0
        %v719 = vadd.f32 %v386, %v718
        %720 = vdwg.mxu0
        %v721 = vmax.f32 %v610, 0.0
        %v722 = vmax.f32 %v612, 0.0
        %v723 = vmax.f32 %v683, 0.0
        %v724 = vmax.f32 %v685, 0.0
        %v725 = vmax.f32 %v614, 0.0
        %v726 = vmax.f32 %v616, 0.0
        %v727 = vmax.f32 %v687, 0.0
        %v728 = vmax.f32 %v689, 0.0
        %v729 = vmax.f32 %v620, 0.0
        %v730 = vmax.f32 %v622, 0.0
        %v731 = vmax.f32 %v693, 0.0
        %v732 = vmax.f32 %v695, 0.0
        %v733 = vmax.f32 %v624, 0.0
        %v734 = vmax.f32 %v626, 0.0
        %v735 = vmax.f32 %v697, 0.0
        %v736 = vmax.f32 %v699, 0.0
        %v737 = vmax.f32 %v630, 0.0
        %v738 = vmax.f32 %v632, 0.0
        %v739 = vmax.f32 %v703, 0.0
        %v740 = vmax.f32 %v705, 0.0
        %v741 = vmax.f32 %v634, 0.0
        %v742 = vmax.f32 %v636, 0.0
        %v743 = vmax.f32 %v707, 0.0
        %v744 = vmax.f32 %v709, 0.0
        %v745 = vmax.f32 %v640, 0.0
        %v746 = vmax.f32 %v642, 0.0
        %v747 = vmax.f32 %v713, 0.0
        %v748 = vmax.f32 %v715, 0.0
        %v749 = vmax.f32 %v644, 0.0
        %v750 = vmax.f32 %v646, 0.0
        %v751 = vmax.f32 %v717, 0.0
        %v752 = vmax.f32 %v719, 0.0
        %v753 = vpack.c.bf16 %v725, %v721
        %v754 = vpack.c.bf16 %v726, %v722
        %v755 = vpack.c.bf16 %v727, %v723
        %v756 = vpack.c.bf16 %v728, %v724
        %v757 = vpack.c.bf16 %v733, %v729
        %v758 = vpack.c.bf16 %v734, %v730
        %v759 = vpack.c.bf16 %v735, %v731
        %v760 = vpack.c.bf16 %v736, %v732
        %v761 = vpack.c.bf16 %v741, %v737
        %v762 = vpack.c.bf16 %v742, %v738
        %v763 = vpack.c.bf16 %v743, %v739
        %v764 = vpack.c.bf16 %v744, %v740
        %v765 = vpack.c.bf16 %v749, %v745
        %v766 = vpack.c.bf16 %v750, %v746
        %v767 = vpack.c.bf16 %v751, %v747
        %v768 = vpack.c.bf16 %v752, %v748
        %v769 = vld [vmem:[#allocation7] sm:$0xff]
        %v770 = vld [vmem:[#allocation7 + $0x8] sm:$0xff]
        %v771 = vld [vmem:[#allocation7 + $0x10] sm:$0xff]
        %v772 = vld [vmem:[#allocation7 + $0x18] sm:$0xff]
        %v773 = vld [vmem:[#allocation7 + $0x20] sm:$0xff]
        %v774 = vld [vmem:[#allocation7 + $0x28] sm:$0xff]
        %v775 = vld [vmem:[#allocation7 + $0x30] sm:$0xff]
        %v776 = vld [vmem:[#allocation7 + $0x38] sm:$0xff]
        %v777 = vld [vmem:[#allocation7 + $0x40] sm:$0xff]
        %v778 = vld [vmem:[#allocation7 + $0x48] sm:$0xff]
        %v779 = vld [vmem:[#allocation7 + $0x50] sm:$0xff]
        %v780 = vld [vmem:[#allocation7 + $0x58] sm:$0xff]
        %v781 = vld [vmem:[#allocation7 + $0x60] sm:$0xff]
        %v782 = vld [vmem:[#allocation7 + $0x68] sm:$0xff]
        %v783 = vld [vmem:[#allocation7 + $0x70] sm:$0xff]
        %v784 = vld [vmem:[#allocation7 + $0x78] sm:$0xff]
        %v785 = vld [vmem:[#allocation7 + $0x80] sm:$0xff]
        %v786 = vld [vmem:[#allocation7 + $0x88] sm:$0xff]
        %v787 = vld [vmem:[#allocation7 + $0x90] sm:$0xff]
        %v788 = vld [vmem:[#allocation7 + $0x98] sm:$0xff]
        %v789 = vld [vmem:[#allocation7 + $0xa0] sm:$0xff]
        %v790 = vld [vmem:[#allocation7 + $0xa8] sm:$0xff]
        %v791 = vld [vmem:[#allocation7 + $0xb0] sm:$0xff]
        %v792 = vld [vmem:[#allocation7 + $0xb8] sm:$0xff]
        %v793 = vld [vmem:[#allocation7 + $0xc0] sm:$0xff]
        %v794 = vld [vmem:[#allocation7 + $0xc8] sm:$0xff]
        %v795 = vld [vmem:[#allocation7 + $0xd0] sm:$0xff]
        %v796 = vld [vmem:[#allocation7 + $0xd8] sm:$0xff]
        %v797 = vld [vmem:[#allocation7 + $0xe0] sm:$0xff]
        %v798 = vld [vmem:[#allocation7 + $0xe8] sm:$0xff]
        %v799 = vld [vmem:[#allocation7 + $0xf0] sm:$0xff]
        %v800 = vld [vmem:[#allocation7 + $0xf8] sm:$0xff]
        %v801 = vld [vmem:[#allocation7 + $0x100] sm:$0xff]
        %v802 = vld [vmem:[#allocation7 + $0x108] sm:$0xff]
        %v803 = vld [vmem:[#allocation7 + $0x110] sm:$0xff]
        %v804 = vld [vmem:[#allocation7 + $0x118] sm:$0xff]
        %v805 = vld [vmem:[#allocation7 + $0x120] sm:$0xff]
        %v806 = vld [vmem:[#allocation7 + $0x128] sm:$0xff]
        %v807 = vld [vmem:[#allocation7 + $0x130] sm:$0xff]
        %v808 = vld [vmem:[#allocation7 + $0x138] sm:$0xff]
        %v809 = vld [vmem:[#allocation7 + $0x140] sm:$0xff]
        %v810 = vld [vmem:[#allocation7 + $0x148] sm:$0xff]
        %v811 = vld [vmem:[#allocation7 + $0x150] sm:$0xff]
        %v812 = vld [vmem:[#allocation7 + $0x158] sm:$0xff]
        %v813 = vld [vmem:[#allocation7 + $0x160] sm:$0xff]
        %v814 = vld [vmem:[#allocation7 + $0x168] sm:$0xff]
        %v815 = vld [vmem:[#allocation7 + $0x170] sm:$0xff]
        %v816 = vld [vmem:[#allocation7 + $0x178] sm:$0xff]
        %v817 = vld [vmem:[#allocation7 + $0x180] sm:$0xff]
        %v818 = vld [vmem:[#allocation7 + $0x188] sm:$0xff]
        %v819 = vld [vmem:[#allocation7 + $0x190] sm:$0xff]
        %v820 = vld [vmem:[#allocation7 + $0x198] sm:$0xff]
        %v821 = vld [vmem:[#allocation7 + $0x1a0] sm:$0xff]
        %v822 = vld [vmem:[#allocation7 + $0x1a8] sm:$0xff]
        %v823 = vld [vmem:[#allocation7 + $0x1b0] sm:$0xff]
        %v824 = vld [vmem:[#allocation7 + $0x1b8] sm:$0xff]
        %v825 = vld [vmem:[#allocation7 + $0x1c0] sm:$0xff]
        %v826 = vld [vmem:[#allocation7 + $0x1c8] sm:$0xff]
        %v827 = vld [vmem:[#allocation7 + $0x1d0] sm:$0xff]
        %v828 = vld [vmem:[#allocation7 + $0x1d8] sm:$0xff]
        %v829 = vld [vmem:[#allocation7 + $0x1e0] sm:$0xff]
        %v830 = vld [vmem:[#allocation7 + $0x1e8] sm:$0xff]
        %v831 = vld [vmem:[#allocation7 + $0x1f0] sm:$0xff]
        %v832 = vld [vmem:[#allocation7 + $0x1f8] sm:$0xff]
        %v833 = vld [vmem:[#allocation7 + $0x200] sm:$0xff]
        %v834 = vld [vmem:[#allocation7 + $0x208] sm:$0xff]
        %v835 = vld [vmem:[#allocation7 + $0x210] sm:$0xff]
        %v836 = vld [vmem:[#allocation7 + $0x218] sm:$0xff]
        %v837 = vld [vmem:[#allocation7 + $0x220] sm:$0xff]
        %v838 = vld [vmem:[#allocation7 + $0x228] sm:$0xff]
        %v839 = vld [vmem:[#allocation7 + $0x230] sm:$0xff]
        %v840 = vld [vmem:[#allocation7 + $0x238] sm:$0xff]
        %v841 = vld [vmem:[#allocation7 + $0x240] sm:$0xff]
        %v842 = vld [vmem:[#allocation7 + $0x248] sm:$0xff]
        %v843 = vld [vmem:[#allocation7 + $0x250] sm:$0xff]
        %v844 = vld [vmem:[#allocation7 + $0x258] sm:$0xff]
        %v845 = vld [vmem:[#allocation7 + $0x260] sm:$0xff]
        %v846 = vld [vmem:[#allocation7 + $0x268] sm:$0xff]
        %v847 = vld [vmem:[#allocation7 + $0x270] sm:$0xff]
        %v848 = vld [vmem:[#allocation7 + $0x278] sm:$0xff]
        %v849 = vld [vmem:[#allocation7 + $0x280] sm:$0xff]
        %v850 = vld [vmem:[#allocation7 + $0x288] sm:$0xff]
        %v851 = vld [vmem:[#allocation7 + $0x290] sm:$0xff]
        %v852 = vld [vmem:[#allocation7 + $0x298] sm:$0xff]
        %v853 = vld [vmem:[#allocation7 + $0x2a0] sm:$0xff]
        %v854 = vld [vmem:[#allocation7 + $0x2a8] sm:$0xff]
        %v855 = vld [vmem:[#allocation7 + $0x2b0] sm:$0xff]
        %v856 = vld [vmem:[#allocation7 + $0x2b8] sm:$0xff]
        %v857 = vld [vmem:[#allocation7 + $0x2c0] sm:$0xff]
        %v858 = vld [vmem:[#allocation7 + $0x2c8] sm:$0xff]
        %v859 = vld [vmem:[#allocation7 + $0x2d0] sm:$0xff]
        %v860 = vld [vmem:[#allocation7 + $0x2d8] sm:$0xff]
        %v861 = vld [vmem:[#allocation7 + $0x2e0] sm:$0xff]
        %v862 = vld [vmem:[#allocation7 + $0x2e8] sm:$0xff]
        %v863 = vld [vmem:[#allocation7 + $0x2f0] sm:$0xff]
        %v864 = vld [vmem:[#allocation7 + $0x2f8] sm:$0xff]
        %v865 = vld [vmem:[#allocation7 + $0x300] sm:$0xff]
        %v866 = vld [vmem:[#allocation7 + $0x308] sm:$0xff]
        %v867 = vld [vmem:[#allocation7 + $0x310] sm:$0xff]
        %v868 = vld [vmem:[#allocation7 + $0x318] sm:$0xff]
        %v869 = vld [vmem:[#allocation7 + $0x320] sm:$0xff]
        %v870 = vld [vmem:[#allocation7 + $0x328] sm:$0xff]
        %v871 = vld [vmem:[#allocation7 + $0x330] sm:$0xff]
        %v872 = vld [vmem:[#allocation7 + $0x338] sm:$0xff]
        %v873 = vld [vmem:[#allocation7 + $0x340] sm:$0xff]
        %v874 = vld [vmem:[#allocation7 + $0x348] sm:$0xff]
        %v875 = vld [vmem:[#allocation7 + $0x350] sm:$0xff]
        %v876 = vld [vmem:[#allocation7 + $0x358] sm:$0xff]
        %v877 = vld [vmem:[#allocation7 + $0x360] sm:$0xff]
        %v878 = vld [vmem:[#allocation7 + $0x368] sm:$0xff]
        %v879 = vld [vmem:[#allocation7 + $0x370] sm:$0xff]
        %v880 = vld [vmem:[#allocation7 + $0x378] sm:$0xff]
        %v881 = vld [vmem:[#allocation7 + $0x380] sm:$0xff]
        %v882 = vld [vmem:[#allocation7 + $0x388] sm:$0xff]
        %v883 = vld [vmem:[#allocation7 + $0x390] sm:$0xff]
        %v884 = vld [vmem:[#allocation7 + $0x398] sm:$0xff]
        %v885 = vld [vmem:[#allocation7 + $0x3a0] sm:$0xff]
        %v886 = vld [vmem:[#allocation7 + $0x3a8] sm:$0xff]
        %v887 = vld [vmem:[#allocation7 + $0x3b0] sm:$0xff]
        %v888 = vld [vmem:[#allocation7 + $0x3b8] sm:$0xff]
        %v889 = vld [vmem:[#allocation7 + $0x3c0] sm:$0xff]
        %v890 = vld [vmem:[#allocation7 + $0x3c8] sm:$0xff]
        %v891 = vld [vmem:[#allocation7 + $0x3d0] sm:$0xff]
        %v892 = vld [vmem:[#allocation7 + $0x3d8] sm:$0xff]
        %v893 = vld [vmem:[#allocation7 + $0x3e0] sm:$0xff]
        %v894 = vld [vmem:[#allocation7 + $0x3e8] sm:$0xff]
        %v895 = vld [vmem:[#allocation7 + $0x3f0] sm:$0xff]
        %v896 = vld [vmem:[#allocation7 + $0x3f8] sm:$0xff]
        %v897 = vld [vmem:[%s4] sm:$0xf]
        %v899 = vlaneseq
        %v900 = vshrl.u32 %v899, 7
        %v901 = vsub.s32 0, %v900
        %v902 = vrot.slane %v897, %v901
        %v903 = vlaneseq
        %v904 = vshrl.u32 %v903, 7
        %v905 = vsub.s32 1, %v904
        %v906 = vrot.slane %v897, %v905
        %v907 = vlaneseq
        %v908 = vshrl.u32 %v907, 7
        %v909 = vsub.s32 2, %v908
        %v910 = vrot.slane %v897, %v909
        %v911 = vlaneseq
        %v912 = vshrl.u32 %v911, 7
        %v913 = vsub.s32 3, %v912
        %v914 = vrot.slane %v897, %v913
        %v1047 = vunpack.c.l.b16 %v769
        %v1048 = vunpack.c.h.b16 %v769
        %v1049 = vunpack.c.l.b16 %v770
        %v1050 = vunpack.c.h.b16 %v770
        %v1051 = vunpack.c.l.b16 %v771
        %v1052 = vunpack.c.h.b16 %v771
        %v1053 = vunpack.c.l.b16 %v772
        %v1054 = vunpack.c.h.b16 %v772
        %v1055 = vunpack.c.l.b16 %v773
        %v1056 = vunpack.c.h.b16 %v773
        %v1057 = vunpack.c.l.b16 %v774
        %v1058 = vunpack.c.h.b16 %v774
        %v1059 = vunpack.c.l.b16 %v775
        %v1060 = vunpack.c.h.b16 %v775
        %v1061 = vunpack.c.l.b16 %v776
        %v1062 = vunpack.c.h.b16 %v776
        %v1063 = vunpack.c.l.b16 %v777
        %v1064 = vunpack.c.h.b16 %v777
        %v1065 = vunpack.c.l.b16 %v778
        %v1066 = vunpack.c.h.b16 %v778
        %v1067 = vunpack.c.l.b16 %v779
        %v1068 = vunpack.c.h.b16 %v779
        %v1069 = vunpack.c.l.b16 %v780
        %v1070 = vunpack.c.h.b16 %v780
        %v1071 = vunpack.c.l.b16 %v781
        %v1072 = vunpack.c.h.b16 %v781
        %v1073 = vunpack.c.l.b16 %v782
        %v1074 = vunpack.c.h.b16 %v782
        %v1075 = vunpack.c.l.b16 %v783
        %v1076 = vunpack.c.h.b16 %v783
        %v1077 = vunpack.c.l.b16 %v784
        %v1078 = vunpack.c.h.b16 %v784
        %v1079 = vunpack.c.l.b16 %v785
        %v1080 = vunpack.c.h.b16 %v785
        %v1081 = vunpack.c.l.b16 %v786
        %v1082 = vunpack.c.h.b16 %v786
        %v1083 = vunpack.c.l.b16 %v787
        %v1084 = vunpack.c.h.b16 %v787
        %v1085 = vunpack.c.l.b16 %v788
        %v1086 = vunpack.c.h.b16 %v788
        %v1087 = vunpack.c.l.b16 %v789
        %v1088 = vunpack.c.h.b16 %v789
        %v1089 = vunpack.c.l.b16 %v790
        %v1090 = vunpack.c.h.b16 %v790
        %v1091 = vunpack.c.l.b16 %v791
        %v1092 = vunpack.c.h.b16 %v791
        %v1093 = vunpack.c.l.b16 %v792
        %v1094 = vunpack.c.h.b16 %v792
        %v1095 = vunpack.c.l.b16 %v793
        %v1096 = vunpack.c.h.b16 %v793
        %v1097 = vunpack.c.l.b16 %v794
        %v1098 = vunpack.c.h.b16 %v794
        %v1099 = vunpack.c.l.b16 %v795
        %v1100 = vunpack.c.h.b16 %v795
        %v1101 = vunpack.c.l.b16 %v796
        %v1102 = vunpack.c.h.b16 %v796
        %v1103 = vunpack.c.l.b16 %v797
        %v1104 = vunpack.c.h.b16 %v797
        %v1105 = vunpack.c.l.b16 %v798
        %v1106 = vunpack.c.h.b16 %v798
        %v1107 = vunpack.c.l.b16 %v799
        %v1108 = vunpack.c.h.b16 %v799
        %v1109 = vunpack.c.l.b16 %v800
        %v1110 = vunpack.c.h.b16 %v800
        %v1111 = vunpack.c.l.b16 %v801
        %v1112 = vunpack.c.h.b16 %v801
        %v1113 = vunpack.c.l.b16 %v802
        %v1114 = vunpack.c.h.b16 %v802
        %v1115 = vunpack.c.l.b16 %v803
        %v1116 = vunpack.c.h.b16 %v803
        %v1117 = vunpack.c.l.b16 %v804
        %v1118 = vunpack.c.h.b16 %v804
        %v1119 = vunpack.c.l.b16 %v805
        %v1120 = vunpack.c.h.b16 %v805
        %v1121 = vunpack.c.l.b16 %v806
        %v1122 = vunpack.c.h.b16 %v806
        %v1123 = vunpack.c.l.b16 %v807
        %v1124 = vunpack.c.h.b16 %v807
        %v1125 = vunpack.c.l.b16 %v808
        %v1126 = vunpack.c.h.b16 %v808
        %v1127 = vunpack.c.l.b16 %v809
        %v1128 = vunpack.c.h.b16 %v809
        %v1129 = vunpack.c.l.b16 %v810
        %v1130 = vunpack.c.h.b16 %v810
        %v1131 = vunpack.c.l.b16 %v811
        %v1132 = vunpack.c.h.b16 %v811
        %v1133 = vunpack.c.l.b16 %v812
        %v1134 = vunpack.c.h.b16 %v812
        %v1135 = vunpack.c.l.b16 %v813
        %v1136 = vunpack.c.h.b16 %v813
        %v1137 = vunpack.c.l.b16 %v814
        %v1138 = vunpack.c.h.b16 %v814
        %v1139 = vunpack.c.l.b16 %v815
        %v1140 = vunpack.c.h.b16 %v815
        %v1141 = vunpack.c.l.b16 %v816
        %v1142 = vunpack.c.h.b16 %v816
        %v1143 = vunpack.c.l.b16 %v817
        %v1144 = vunpack.c.h.b16 %v817
        %v1145 = vunpack.c.l.b16 %v818
        %v1146 = vunpack.c.h.b16 %v818
        %v1147 = vunpack.c.l.b16 %v819
        %v1148 = vunpack.c.h.b16 %v819
        %v1149 = vunpack.c.l.b16 %v820
        %v1150 = vunpack.c.h.b16 %v820
        %v1151 = vunpack.c.l.b16 %v821
        %v1152 = vunpack.c.h.b16 %v821
        %v1153 = vunpack.c.l.b16 %v822
        %v1154 = vunpack.c.h.b16 %v822
        %v1155 = vunpack.c.l.b16 %v823
        %v1156 = vunpack.c.h.b16 %v823
        %v1157 = vunpack.c.l.b16 %v824
        %v1158 = vunpack.c.h.b16 %v824
        %v1159 = vunpack.c.l.b16 %v825
        %v1160 = vunpack.c.h.b16 %v825
        %v1161 = vunpack.c.l.b16 %v826
        %v1162 = vunpack.c.h.b16 %v826
        %v1163 = vunpack.c.l.b16 %v827
        %v1164 = vunpack.c.h.b16 %v827
        %v1165 = vunpack.c.l.b16 %v828
        %v1166 = vunpack.c.h.b16 %v828
        %v1167 = vunpack.c.l.b16 %v829
        %v1168 = vunpack.c.h.b16 %v829
        %v1169 = vunpack.c.l.b16 %v830
        %v1170 = vunpack.c.h.b16 %v830
        %v1171 = vunpack.c.l.b16 %v831
        %v1172 = vunpack.c.h.b16 %v831
        %v1173 = vunpack.c.l.b16 %v832
        %v1174 = vunpack.c.h.b16 %v832
        %v1175 = vunpack.c.l.b16 %v833
        %v1176 = vunpack.c.h.b16 %v833
        %v1177 = vunpack.c.l.b16 %v834
        %v1178 = vunpack.c.h.b16 %v834
        %v1179 = vunpack.c.l.b16 %v835
        %v1180 = vunpack.c.h.b16 %v835
        %v1181 = vunpack.c.l.b16 %v836
        %v1182 = vunpack.c.h.b16 %v836
        %v1183 = vunpack.c.l.b16 %v837
        %v1184 = vunpack.c.h.b16 %v837
        %v1185 = vunpack.c.l.b16 %v838
        %v1186 = vunpack.c.h.b16 %v838
        %v1187 = vunpack.c.l.b16 %v839
        %v1188 = vunpack.c.h.b16 %v839
        %v1189 = vunpack.c.l.b16 %v840
        %v1190 = vunpack.c.h.b16 %v840
        %v1191 = vunpack.c.l.b16 %v841
        %v1192 = vunpack.c.h.b16 %v841
        %v1193 = vunpack.c.l.b16 %v842
        %v1194 = vunpack.c.h.b16 %v842
        %v1195 = vunpack.c.l.b16 %v843
        %v1196 = vunpack.c.h.b16 %v843
        %v1197 = vunpack.c.l.b16 %v844
        %v1198 = vunpack.c.h.b16 %v844
        %v1199 = vunpack.c.l.b16 %v845
        %v1200 = vunpack.c.h.b16 %v845
        %v1201 = vunpack.c.l.b16 %v846
        %v1202 = vunpack.c.h.b16 %v846
        %v1203 = vunpack.c.l.b16 %v847
        %v1204 = vunpack.c.h.b16 %v847
        %v1205 = vunpack.c.l.b16 %v848
        %v1206 = vunpack.c.h.b16 %v848
        %v1207 = vunpack.c.l.b16 %v849
        %v1208 = vunpack.c.h.b16 %v849
        %v1209 = vunpack.c.l.b16 %v850
        %v1210 = vunpack.c.h.b16 %v850
        %v1211 = vunpack.c.l.b16 %v851
        %v1212 = vunpack.c.h.b16 %v851
        %v1213 = vunpack.c.l.b16 %v852
        %v1214 = vunpack.c.h.b16 %v852
        %v1215 = vunpack.c.l.b16 %v853
        %v1216 = vunpack.c.h.b16 %v853
        %v1217 = vunpack.c.l.b16 %v854
        %v1218 = vunpack.c.h.b16 %v854
        %v1219 = vunpack.c.l.b16 %v855
        %v1220 = vunpack.c.h.b16 %v855
        %v1221 = vunpack.c.l.b16 %v856
        %v1222 = vunpack.c.h.b16 %v856
        %v1223 = vunpack.c.l.b16 %v857
        %v1224 = vunpack.c.h.b16 %v857
        %v1225 = vunpack.c.l.b16 %v858
        %v1226 = vunpack.c.h.b16 %v858
        %v1227 = vunpack.c.l.b16 %v859
        %v1228 = vunpack.c.h.b16 %v859
        %v1229 = vunpack.c.l.b16 %v860
        %v1230 = vunpack.c.h.b16 %v860
        %v1231 = vunpack.c.l.b16 %v861
        %v1232 = vunpack.c.h.b16 %v861
        %v1233 = vunpack.c.l.b16 %v862
        %v1234 = vunpack.c.h.b16 %v862
        %v1235 = vunpack.c.l.b16 %v863
        %v1236 = vunpack.c.h.b16 %v863
        %v1237 = vunpack.c.l.b16 %v864
        %v1238 = vunpack.c.h.b16 %v864
        %v1239 = vunpack.c.l.b16 %v865
        %v1240 = vunpack.c.h.b16 %v865
        %v1241 = vunpack.c.l.b16 %v866
        %v1242 = vunpack.c.h.b16 %v866
        %v1243 = vunpack.c.l.b16 %v867
        %v1244 = vunpack.c.h.b16 %v867
        %v1245 = vunpack.c.l.b16 %v868
        %v1246 = vunpack.c.h.b16 %v868
        %v1247 = vunpack.c.l.b16 %v869
        %v1248 = vunpack.c.h.b16 %v869
        %v1249 = vunpack.c.l.b16 %v870
        %v1250 = vunpack.c.h.b16 %v870
        %v1251 = vunpack.c.l.b16 %v871
        %v1252 = vunpack.c.h.b16 %v871
        %v1253 = vunpack.c.l.b16 %v872
        %v1254 = vunpack.c.h.b16 %v872
        %v1255 = vunpack.c.l.b16 %v873
        %v1256 = vunpack.c.h.b16 %v873
        %v1257 = vunpack.c.l.b16 %v874
        %v1258 = vunpack.c.h.b16 %v874
        %v1259 = vunpack.c.l.b16 %v875
        %v1260 = vunpack.c.h.b16 %v875
        %v1261 = vunpack.c.l.b16 %v876
        %v1262 = vunpack.c.h.b16 %v876
        %v1263 = vunpack.c.l.b16 %v877
        %v1264 = vunpack.c.h.b16 %v877
        %v1265 = vunpack.c.l.b16 %v878
        %v1266 = vunpack.c.h.b16 %v878
        %v1267 = vunpack.c.l.b16 %v879
        %v1268 = vunpack.c.h.b16 %v879
        %v1269 = vunpack.c.l.b16 %v880
        %v1270 = vunpack.c.h.b16 %v880
        %v1271 = vunpack.c.l.b16 %v881
        %v1272 = vunpack.c.h.b16 %v881
        %v1273 = vunpack.c.l.b16 %v882
        %v1274 = vunpack.c.h.b16 %v882
        %v1275 = vunpack.c.l.b16 %v883
        %v1276 = vunpack.c.h.b16 %v883
        %v1277 = vunpack.c.l.b16 %v884
        %v1278 = vunpack.c.h.b16 %v884
        %v1279 = vunpack.c.l.b16 %v885
        %v1280 = vunpack.c.h.b16 %v885
        %v1281 = vunpack.c.l.b16 %v886
        %v1282 = vunpack.c.h.b16 %v886
        %v1283 = vunpack.c.l.b16 %v887
        %v1284 = vunpack.c.h.b16 %v887
        %v1285 = vunpack.c.l.b16 %v888
        %v1286 = vunpack.c.h.b16 %v888
        %v1287 = vunpack.c.l.b16 %v889
        %v1288 = vunpack.c.h.b16 %v889
        %v1289 = vunpack.c.l.b16 %v890
        %v1290 = vunpack.c.h.b16 %v890
        %v1291 = vunpack.c.l.b16 %v891
        %v1292 = vunpack.c.h.b16 %v891
        %v1293 = vunpack.c.l.b16 %v892
        %v1294 = vunpack.c.h.b16 %v892
        %v1295 = vunpack.c.l.b16 %v893
        %v1296 = vunpack.c.h.b16 %v893
        %v1297 = vunpack.c.l.b16 %v894
        %v1298 = vunpack.c.h.b16 %v894
        %v1299 = vunpack.c.l.b16 %v895
        %v1300 = vunpack.c.h.b16 %v895
        %v1301 = vunpack.c.l.b16 %v896
        %v1302 = vunpack.c.h.b16 %v896
        %v1303 = vpack.c.b16 %v1051, %v1047
        %v1304 = vpack.c.b16 %v1052, %v1048
        %v1305 = vpack.c.b16 %v1053, %v1049
        %v1306 = vpack.c.b16 %v1054, %v1050
        %v1307 = vpack.c.b16 %v1059, %v1055
        %v1308 = vpack.c.b16 %v1060, %v1056
        %v1309 = vpack.c.b16 %v1061, %v1057
        %v1310 = vpack.c.b16 %v1062, %v1058
        %v1311 = vpack.c.b16 %v1067, %v1063
        %v1312 = vpack.c.b16 %v1068, %v1064
        %v1313 = vpack.c.b16 %v1069, %v1065
        %v1314 = vpack.c.b16 %v1070, %v1066
        %v1315 = vpack.c.b16 %v1075, %v1071
        %v1316 = vpack.c.b16 %v1076, %v1072
        %v1317 = vpack.c.b16 %v1077, %v1073
        %v1318 = vpack.c.b16 %v1078, %v1074
        %v1319 = vpack.c.b16 %v1083, %v1079
        %v1320 = vpack.c.b16 %v1084, %v1080
        %v1321 = vpack.c.b16 %v1085, %v1081
        %v1322 = vpack.c.b16 %v1086, %v1082
        %v1323 = vpack.c.b16 %v1091, %v1087
        %v1324 = vpack.c.b16 %v1092, %v1088
        %v1325 = vpack.c.b16 %v1093, %v1089
        %v1326 = vpack.c.b16 %v1094, %v1090
        %v1327 = vpack.c.b16 %v1099, %v1095
        %v1328 = vpack.c.b16 %v1100, %v1096
        %v1329 = vpack.c.b16 %v1101, %v1097
        %v1330 = vpack.c.b16 %v1102, %v1098
        %v1331 = vpack.c.b16 %v1107, %v1103
        %v1332 = vpack.c.b16 %v1108, %v1104
        %v1333 = vpack.c.b16 %v1109, %v1105
        %v1334 = vpack.c.b16 %v1110, %v1106
        %v1335 = vpack.c.b16 %v1115, %v1111
        %v1336 = vpack.c.b16 %v1116, %v1112
        %v1337 = vpack.c.b16 %v1117, %v1113
        %v1338 = vpack.c.b16 %v1118, %v1114
        %v1339 = vpack.c.b16 %v1123, %v1119
        %v1340 = vpack.c.b16 %v1124, %v1120
        %v1341 = vpack.c.b16 %v1125, %v1121
        %v1342 = vpack.c.b16 %v1126, %v1122
        %v1343 = vpack.c.b16 %v1131, %v1127
        %v1344 = vpack.c.b16 %v1132, %v1128
        %v1345 = vpack.c.b16 %v1133, %v1129
        %v1346 = vpack.c.b16 %v1134, %v1130
        %v1347 = vpack.c.b16 %v1139, %v1135
        %v1348 = vpack.c.b16 %v1140, %v1136
        %v1349 = vpack.c.b16 %v1141, %v1137
        %v1350 = vpack.c.b16 %v1142, %v1138
        %v1351 = vpack.c.b16 %v1147, %v1143
        %v1352 = vpack.c.b16 %v1148, %v1144
        %v1353 = vpack.c.b16 %v1149, %v1145
        %v1354 = vpack.c.b16 %v1150, %v1146
        %v1355 = vpack.c.b16 %v1155, %v1151
        %v1356 = vpack.c.b16 %v1156, %v1152
        %v1357 = vpack.c.b16 %v1157, %v1153
        %v1358 = vpack.c.b16 %v1158, %v1154
        %v1359 = vpack.c.b16 %v1163, %v1159
        %v1360 = vpack.c.b16 %v1164, %v1160
        %v1361 = vpack.c.b16 %v1165, %v1161
        %v1362 = vpack.c.b16 %v1166, %v1162
        %v1363 = vpack.c.b16 %v1171, %v1167
        %v1364 = vpack.c.b16 %v1172, %v1168
        %v1365 = vpack.c.b16 %v1173, %v1169
        %v1366 = vpack.c.b16 %v1174, %v1170
        %v1367 = vpack.c.b16 %v1179, %v1175
        %v1368 = vpack.c.b16 %v1180, %v1176
        %v1369 = vpack.c.b16 %v1181, %v1177
        %v1370 = vpack.c.b16 %v1182, %v1178
        %v1371 = vpack.c.b16 %v1187, %v1183
        %v1372 = vpack.c.b16 %v1188, %v1184
        %v1373 = vpack.c.b16 %v1189, %v1185
        %v1374 = vpack.c.b16 %v1190, %v1186
        %v1375 = vpack.c.b16 %v1195, %v1191
        %v1376 = vpack.c.b16 %v1196, %v1192
        %v1377 = vpack.c.b16 %v1197, %v1193
        %v1378 = vpack.c.b16 %v1198, %v1194
        %v1379 = vpack.c.b16 %v1203, %v1199
        %v1380 = vpack.c.b16 %v1204, %v1200
        %v1381 = vpack.c.b16 %v1205, %v1201
        %v1382 = vpack.c.b16 %v1206, %v1202
        %v1383 = vpack.c.b16 %v1211, %v1207
        %v1384 = vpack.c.b16 %v1212, %v1208
        %v1385 = vpack.c.b16 %v1213, %v1209
        %v1386 = vpack.c.b16 %v1214, %v1210
        %v1387 = vpack.c.b16 %v1219, %v1215
        %v1388 = vpack.c.b16 %v1220, %v1216
        %v1389 = vpack.c.b16 %v1221, %v1217
        %v1390 = vpack.c.b16 %v1222, %v1218
        %v1391 = vpack.c.b16 %v1227, %v1223
        %v1392 = vpack.c.b16 %v1228, %v1224
        %v1393 = vpack.c.b16 %v1229, %v1225
        %v1394 = vpack.c.b16 %v1230, %v1226
        %v1395 = vpack.c.b16 %v1235, %v1231
        %v1396 = vpack.c.b16 %v1236, %v1232
        %v1397 = vpack.c.b16 %v1237, %v1233
        %v1398 = vpack.c.b16 %v1238, %v1234
        %v1399 = vpack.c.b16 %v1243, %v1239
        %v1400 = vpack.c.b16 %v1244, %v1240
        %v1401 = vpack.c.b16 %v1245, %v1241
        %v1402 = vpack.c.b16 %v1246, %v1242
        %v1403 = vpack.c.b16 %v1251, %v1247
        %v1404 = vpack.c.b16 %v1252, %v1248
        %v1405 = vpack.c.b16 %v1253, %v1249
        %v1406 = vpack.c.b16 %v1254, %v1250
        %v1407 = vpack.c.b16 %v1259, %v1255
        %v1408 = vpack.c.b16 %v1260, %v1256
        %v1409 = vpack.c.b16 %v1261, %v1257
        %v1410 = vpack.c.b16 %v1262, %v1258
        %v1411 = vpack.c.b16 %v1267, %v1263
        %v1412 = vpack.c.b16 %v1268, %v1264
        %v1413 = vpack.c.b16 %v1269, %v1265
        %v1414 = vpack.c.b16 %v1270, %v1266
        %v1415 = vpack.c.b16 %v1275, %v1271
        %v1416 = vpack.c.b16 %v1276, %v1272
        %v1417 = vpack.c.b16 %v1277, %v1273
        %v1418 = vpack.c.b16 %v1278, %v1274
        %v1419 = vpack.c.b16 %v1283, %v1279
        %v1420 = vpack.c.b16 %v1284, %v1280
        %v1421 = vpack.c.b16 %v1285, %v1281
        %v1422 = vpack.c.b16 %v1286, %v1282
        %v1423 = vpack.c.b16 %v1291, %v1287
        %v1424 = vpack.c.b16 %v1292, %v1288
        %v1425 = vpack.c.b16 %v1293, %v1289
        %v1426 = vpack.c.b16 %v1294, %v1290
        %v1427 = vpack.c.b16 %v1299, %v1295
        %v1428 = vpack.c.b16 %v1300, %v1296
        %v1429 = vpack.c.b16 %v1301, %v1297
        %v1430 = vpack.c.b16 %v1302, %v1298
        %1559 = vmatprep.subr.bf16.mxu0 %v1304
        %1560 = vmatpush1.bf16.msra.mxu0 %v1303
        %1561 = vmatprep.subr.bf16.mxu0 %v1308
        %1562 = vmatpush1.bf16.msra.mxu0 %v1307
        %1563 = vmatprep.subr.bf16.mxu0 %v1312
        %1564 = vmatpush1.bf16.msra.mxu0 %v1311
        %1565 = vmatprep.subr.bf16.mxu0 %v1316
        %1566 = vmatpush1.bf16.msra.mxu0 %v1315
        %1567 = vmatprep.subr.bf16.mxu0 %v1320
        %1568 = vmatpush1.bf16.msra.mxu0 %v1319
        %1569 = vmatprep.subr.bf16.mxu0 %v1324
        %1570 = vmatpush1.bf16.msra.mxu0 %v1323
        %1571 = vmatprep.subr.bf16.mxu0 %v1328
        %1572 = vmatpush1.bf16.msra.mxu0 %v1327
        %1573 = vmatprep.subr.bf16.mxu0 %v1332
        %1574 = vmatpush1.bf16.msra.mxu0 %v1331
        %1575 = vmatprep.subr.bf16.mxu0 %v1336
        %1576 = vmatpush1.bf16.msra.mxu0 %v1335
        %1577 = vmatprep.subr.bf16.mxu0 %v1340
        %1578 = vmatpush1.bf16.msra.mxu0 %v1339
        %1579 = vmatprep.subr.bf16.mxu0 %v1344
        %1580 = vmatpush1.bf16.msra.mxu0 %v1343
        %1581 = vmatprep.subr.bf16.mxu0 %v1348
        %1582 = vmatpush1.bf16.msra.mxu0 %v1347
        %1583 = vmatprep.subr.bf16.mxu0 %v1352
        %1584 = vmatpush1.bf16.msra.mxu0 %v1351
        %1585 = vmatprep.subr.bf16.mxu0 %v1356
        %1586 = vmatpush1.bf16.msra.mxu0 %v1355
        %1587 = vmatprep.subr.bf16.mxu0 %v1360
        %1588 = vmatpush1.bf16.msra.mxu0 %v1359
        %1589 = vmatprep.subr.bf16.mxu0 %v1364
        %1590 = vmatpush1.bf16.msra.mxu0 %v1363
        %1591 = vmatprep.mubr.bf16.mxu0 %v754
        %1592 = vmatmul.mubr.bf16.gmra.mrb[0].mxu0 %v753
        %v1593 = vpop.f32.mrb[0].mxu0
        %v1594 = vadd.f32 %v902, %v1593
        %v1595 = vpop.f32.mrb[0].mxu0
        %v1596 = vadd.f32 %v906, %v1595
        %v1597 = vpop.f32.mrb[0].mxu0
        %v1598 = vadd.f32 %v902, %v1597
        %v1599 = vpop.f32.mrb[0].mxu0
        %v1600 = vadd.f32 %v906, %v1599
        %1601 = vmatprep.mubr.bf16.mxu0 %v758
        %1602 = vmatmul.mubr.bf16.gmra.mrb[0].mxu0 %v757
        %v1603 = vpop.f32.mrb[0].mxu0
        %v1604 = vadd.f32 %v902, %v1603
        %v1605 = vpop.f32.mrb[0].mxu0
        %v1606 = vadd.f32 %v906, %v1605
        %v1607 = vpop.f32.mrb[0].mxu0
        %v1608 = vadd.f32 %v902, %v1607
        %v1609 = vpop.f32.mrb[0].mxu0
        %v1610 = vadd.f32 %v906, %v1609
        %1611 = vmatprep.mubr.bf16.mxu0 %v762
        %1612 = vmatmul.mubr.bf16.gmra.mrb[0].mxu0 %v761
        %v1613 = vpop.f32.mrb[0].mxu0
        %v1614 = vadd.f32 %v902, %v1613
        %v1615 = vpop.f32.mrb[0].mxu0
        %v1616 = vadd.f32 %v906, %v1615
        %v1617 = vpop.f32.mrb[0].mxu0
        %v1618 = vadd.f32 %v902, %v1617
        %v1619 = vpop.f32.mrb[0].mxu0
        %v1620 = vadd.f32 %v906, %v1619
        %1621 = vmatprep.mubr.bf16.mxu0 %v766
        %1622 = vmatmul.mubr.bf16.gmra.mrb[0].mxu0 %v765
        %v1623 = vpop.f32.mrb[0].mxu0
        %v1624 = vadd.f32 %v902, %v1623
        %v1625 = vpop.f32.mrb[0].mxu0
        %v1626 = vadd.f32 %v906, %v1625
        %v1627 = vpop.f32.mrb[0].mxu0
        %v1628 = vadd.f32 %v902, %v1627
        %v1629 = vpop.f32.mrb[0].mxu0
        %v1630 = vadd.f32 %v906, %v1629
        %1631 = vdwg.mxu0
        %1632 = vmatprep.subr.bf16.mxu0 %v1368
        %1633 = vmatpush1.bf16.msra.mxu0 %v1367
        %1634 = vmatprep.subr.bf16.mxu0 %v1372
        %1635 = vmatpush1.bf16.msra.mxu0 %v1371
        %1636 = vmatprep.subr.bf16.mxu0 %v1376
        %1637 = vmatpush1.bf16.msra.mxu0 %v1375
        %1638 = vmatprep.subr.bf16.mxu0 %v1380
        %1639 = vmatpush1.bf16.msra.mxu0 %v1379
        %1640 = vmatprep.subr.bf16.mxu0 %v1384
        %1641 = vmatpush1.bf16.msra.mxu0 %v1383
        %1642 = vmatprep.subr.bf16.mxu0 %v1388
        %1643 = vmatpush1.bf16.msra.mxu0 %v1387
        %1644 = vmatprep.subr.bf16.mxu0 %v1392
        %1645 = vmatpush1.bf16.msra.mxu0 %v1391
        %1646 = vmatprep.subr.bf16.mxu0 %v1396
        %1647 = vmatpush1.bf16.msra.mxu0 %v1395
        %1648 = vmatprep.subr.bf16.mxu0 %v1400
        %1649 = vmatpush1.bf16.msra.mxu0 %v1399
        %1650 = vmatprep.subr.bf16.mxu0 %v1404
        %1651 = vmatpush1.bf16.msra.mxu0 %v1403
        %1652 = vmatprep.subr.bf16.mxu0 %v1408
        %1653 = vmatpush1.bf16.msra.mxu0 %v1407
        %1654 = vmatprep.subr.bf16.mxu0 %v1412
        %1655 = vmatpush1.bf16.msra.mxu0 %v1411
        %1656 = vmatprep.subr.bf16.mxu0 %v1416
        %1657 = vmatpush1.bf16.msra.mxu0 %v1415
        %1658 = vmatprep.subr.bf16.mxu0 %v1420
        %1659 = vmatpush1.bf16.msra.mxu0 %v1419
        %1660 = vmatprep.subr.bf16.mxu0 %v1424
        %1661 = vmatpush1.bf16.msra.mxu0 %v1423
        %1662 = vmatprep.subr.bf16.mxu0 %v1428
        %1663 = vmatpush1.bf16.msra.mxu0 %v1427
        %1664 = vmatprep.mubr.bf16.mxu0 %v756
        %1665 = vmatmul.mubr.bf16.gmra.mrb[0].mxu0 %v755
        %v1666 = vpop.f32.mrb[0].mxu0
        %v1667 = vadd.f32 %v1594, %v1666
        %v1668 = vpop.f32.mrb[0].mxu0
        %v1669 = vadd.f32 %v1596, %v1668
        %v1670 = vpop.f32.mrb[0].mxu0
        %v1671 = vadd.f32 %v1598, %v1670
        %v1672 = vpop.f32.mrb[0].mxu0
        %v1673 = vadd.f32 %v1600, %v1672
        %1674 = vmatprep.mubr.bf16.mxu0 %v760
        %1675 = vmatmul.mubr.bf16.gmra.mrb[0].mxu0 %v759
        %v1676 = vpop.f32.mrb[0].mxu0
        %v1677 = vadd.f32 %v1604, %v1676
        %v1678 = vpop.f32.mrb[0].mxu0
        %v1679 = vadd.f32 %v1606, %v1678
        %v1680 = vpop.f32.mrb[0].mxu0
        %v1681 = vadd.f32 %v1608, %v1680
        %v1682 = vpop.f32.mrb[0].mxu0
        %v1683 = vadd.f32 %v1610, %v1682
        %1684 = vmatprep.mubr.bf16.mxu0 %v764
        %1685 = vmatmul.mubr.bf16.gmra.mrb[0].mxu0 %v763
        %v1686 = vpop.f32.mrb[0].mxu0
        %v1687 = vadd.f32 %v1614, %v1686
        %v1688 = vpop.f32.mrb[0].mxu0
        %v1689 = vadd.f32 %v1616, %v1688
        %v1690 = vpop.f32.mrb[0].mxu0
        %v1691 = vadd.f32 %v1618, %v1690
        %v1692 = vpop.f32.mrb[0].mxu0
        %v1693 = vadd.f32 %v1620, %v1692
        %1694 = vmatprep.mubr.bf16.mxu0 %v768
        %1695 = vmatmul.mubr.bf16.gmra.mrb[0].mxu0 %v767
        %v1696 = vpop.f32.mrb[0].mxu0
        %v1697 = vadd.f32 %v1624, %v1696
        %v1698 = vpop.f32.mrb[0].mxu0
        %v1699 = vadd.f32 %v1626, %v1698
        %v1700 = vpop.f32.mrb[0].mxu0
        %v1701 = vadd.f32 %v1628, %v1700
        %v1702 = vpop.f32.mrb[0].mxu0
        %v1703 = vadd.f32 %v1630, %v1702
        %1704 = vdwg.mxu0
        %1705 = vmatprep.subr.bf16.mxu0 %v1306
        %1706 = vmatpush1.bf16.msra.mxu0 %v1305
        %1707 = vmatprep.subr.bf16.mxu0 %v1310
        %1708 = vmatpush1.bf16.msra.mxu0 %v1309
        %1709 = vmatprep.subr.bf16.mxu0 %v1314
        %1710 = vmatpush1.bf16.msra.mxu0 %v1313
        %1711 = vmatprep.subr.bf16.mxu0 %v1318
        %1712 = vmatpush1.bf16.msra.mxu0 %v1317
        %1713 = vmatprep.subr.bf16.mxu0 %v1322
        %1714 = vmatpush1.bf16.msra.mxu0 %v1321
        %1715 = vmatprep.subr.bf16.mxu0 %v1326
        %1716 = vmatpush1.bf16.msra.mxu0 %v1325
        %1717 = vmatprep.subr.bf16.mxu0 %v1330
        %1718 = vmatpush1.bf16.msra.mxu0 %v1329
        %1719 = vmatprep.subr.bf16.mxu0 %v1334
        %1720 = vmatpush1.bf16.msra.mxu0 %v1333
        %1721 = vmatprep.subr.bf16.mxu0 %v1338
        %1722 = vmatpush1.bf16.msra.mxu0 %v1337
        %1723 = vmatprep.subr.bf16.mxu0 %v1342
        %1724 = vmatpush1.bf16.msra.mxu0 %v1341
        %1725 = vmatprep.subr.bf16.mxu0 %v1346
        %1726 = vmatpush1.bf16.msra.mxu0 %v1345
        %1727 = vmatprep.subr.bf16.mxu0 %v1350
        %1728 = vmatpush1.bf16.msra.mxu0 %v1349
        %1729 = vmatprep.subr.bf16.mxu0 %v1354
        %1730 = vmatpush1.bf16.msra.mxu0 %v1353
        %1731 = vmatprep.subr.bf16.mxu0 %v1358
        %1732 = vmatpush1.bf16.msra.mxu0 %v1357
        %1733 = vmatprep.subr.bf16.mxu0 %v1362
        %1734 = vmatpush1.bf16.msra.mxu0 %v1361
        %1735 = vmatprep.subr.bf16.mxu0 %v1366
        %1736 = vmatpush1.bf16.msra.mxu0 %v1365
        %1737 = vmatprep.mubr.bf16.mxu0 %v754
        %1738 = vmatmul.mubr.bf16.gmra.mrb[0].mxu0 %v753
        %v1739 = vpop.f32.mrb[0].mxu0
        %v1740 = vadd.f32 %v910, %v1739
        %v1741 = vpop.f32.mrb[0].mxu0
        %v1742 = vadd.f32 %v914, %v1741
        %v1743 = vpop.f32.mrb[0].mxu0
        %v1744 = vadd.f32 %v910, %v1743
        %v1745 = vpop.f32.mrb[0].mxu0
        %v1746 = vadd.f32 %v914, %v1745
        %1747 = vmatprep.mubr.bf16.mxu0 %v758
        %1748 = vmatmul.mubr.bf16.gmra.mrb[0].mxu0 %v757
        %v1749 = vpop.f32.mrb[0].mxu0
        %v1750 = vadd.f32 %v910, %v1749
        %v1751 = vpop.f32.mrb[0].mxu0
        %v1752 = vadd.f32 %v914, %v1751
        %v1753 = vpop.f32.mrb[0].mxu0
        %v1754 = vadd.f32 %v910, %v1753
        %v1755 = vpop.f32.mrb[0].mxu0
        %v1756 = vadd.f32 %v914, %v1755
        %1757 = vmatprep.mubr.bf16.mxu0 %v762
        %1758 = vmatmul.mubr.bf16.gmra.mrb[0].mxu0 %v761
        %v1759 = vpop.f32.mrb[0].mxu0
        %v1760 = vadd.f32 %v910, %v1759
        %v1761 = vpop.f32.mrb[0].mxu0
        %v1762 = vadd.f32 %v914, %v1761
        %v1763 = vpop.f32.mrb[0].mxu0
        %v1764 = vadd.f32 %v910, %v1763
        %v1765 = vpop.f32.mrb[0].mxu0
        %v1766 = vadd.f32 %v914, %v1765
        %1767 = vmatprep.mubr.bf16.mxu0 %v766
        %1768 = vmatmul.mubr.bf16.gmra.mrb[0].mxu0 %v765
        %v1769 = vpop.f32.mrb[0].mxu0
        %v1770 = vadd.f32 %v910, %v1769
        %v1771 = vpop.f32.mrb[0].mxu0
        %v1772 = vadd.f32 %v914, %v1771
        %v1773 = vpop.f32.mrb[0].mxu0
        %v1774 = vadd.f32 %v910, %v1773
        %v1775 = vpop.f32.mrb[0].mxu0
        %v1776 = vadd.f32 %v914, %v1775
        %1777 = vdwg.mxu0
        %1778 = vmatprep.subr.bf16.mxu0 %v1370
        %1779 = vmatpush1.bf16.msra.mxu0 %v1369
        %1780 = vmatprep.subr.bf16.mxu0 %v1374
        %1781 = vmatpush1.bf16.msra.mxu0 %v1373
        %1782 = vmatprep.subr.bf16.mxu0 %v1378
        %1783 = vmatpush1.bf16.msra.mxu0 %v1377
        %1784 = vmatprep.subr.bf16.mxu0 %v1382
        %1785 = vmatpush1.bf16.msra.mxu0 %v1381
        %1786 = vmatprep.subr.bf16.mxu0 %v1386
        %1787 = vmatpush1.bf16.msra.mxu0 %v1385
        %1788 = vmatprep.subr.bf16.mxu0 %v1390
        %1789 = vmatpush1.bf16.msra.mxu0 %v1389
        %1790 = vmatprep.subr.bf16.mxu0 %v1394
        %1791 = vmatpush1.bf16.msra.mxu0 %v1393
        %1792 = vmatprep.subr.bf16.mxu0 %v1398
        %1793 = vmatpush1.bf16.msra.mxu0 %v1397
        %1794 = vmatprep.subr.bf16.mxu0 %v1402
        %1795 = vmatpush1.bf16.msra.mxu0 %v1401
        %1796 = vmatprep.subr.bf16.mxu0 %v1406
        %1797 = vmatpush1.bf16.msra.mxu0 %v1405
        %1798 = vmatprep.subr.bf16.mxu0 %v1410
        %1799 = vmatpush1.bf16.msra.mxu0 %v1409
        %1800 = vmatprep.subr.bf16.mxu0 %v1414
        %1801 = vmatpush1.bf16.msra.mxu0 %v1413
        %1802 = vmatprep.subr.bf16.mxu0 %v1418
        %1803 = vmatpush1.bf16.msra.mxu0 %v1417
        %1804 = vmatprep.subr.bf16.mxu0 %v1422
        %1805 = vmatpush1.bf16.msra.mxu0 %v1421
        %1806 = vmatprep.subr.bf16.mxu0 %v1426
        %1807 = vmatpush1.bf16.msra.mxu0 %v1425
        %1808 = vmatprep.subr.bf16.mxu0 %v1430
        %1809 = vmatpush1.bf16.msra.mxu0 %v1429
        %1810 = vmatprep.mubr.bf16.mxu0 %v756
        %1811 = vmatmul.mubr.bf16.gmra.mrb[0].mxu0 %v755
        %v1812 = vpop.f32.mrb[0].mxu0
        %v1813 = vadd.f32 %v1740, %v1812
        %v1814 = vpop.f32.mrb[0].mxu0
        %v1815 = vadd.f32 %v1742, %v1814
        %v1816 = vpop.f32.mrb[0].mxu0
        %v1817 = vadd.f32 %v1744, %v1816
        %v1818 = vpop.f32.mrb[0].mxu0
        %v1819 = vadd.f32 %v1746, %v1818
        %1820 = vmatprep.mubr.bf16.mxu0 %v760
        %1821 = vmatmul.mubr.bf16.gmra.mrb[0].mxu0 %v759
        %v1822 = vpop.f32.mrb[0].mxu0
        %v1823 = vadd.f32 %v1750, %v1822
        %v1824 = vpop.f32.mrb[0].mxu0
        %v1825 = vadd.f32 %v1752, %v1824
        %v1826 = vpop.f32.mrb[0].mxu0
        %v1827 = vadd.f32 %v1754, %v1826
        %v1828 = vpop.f32.mrb[0].mxu0
        %v1829 = vadd.f32 %v1756, %v1828
        %1830 = vmatprep.mubr.bf16.mxu0 %v764
        %1831 = vmatmul.mubr.bf16.gmra.mrb[0].mxu0 %v763
        %v1832 = vpop.f32.mrb[0].mxu0
        %v1833 = vadd.f32 %v1760, %v1832
        %v1834 = vpop.f32.mrb[0].mxu0
        %v1835 = vadd.f32 %v1762, %v1834
        %v1836 = vpop.f32.mrb[0].mxu0
        %v1837 = vadd.f32 %v1764, %v1836
        %v1838 = vpop.f32.mrb[0].mxu0
        %v1839 = vadd.f32 %v1766, %v1838
        %1840 = vmatprep.mubr.bf16.mxu0 %v768
        %1841 = vmatmul.mubr.bf16.gmra.mrb[0].mxu0 %v767
        %v1842 = vpop.f32.mrb[0].mxu0
        %v1843 = vadd.f32 %v1770, %v1842
        %v1844 = vpop.f32.mrb[0].mxu0
        %v1845 = vadd.f32 %v1772, %v1844
        %v1846 = vpop.f32.mrb[0].mxu0
        %v1847 = vadd.f32 %v1774, %v1846
        %v1848 = vpop.f32.mrb[0].mxu0
        %v1849 = vadd.f32 %v1776, %v1848
        %1850 = vdwg.mxu0
        %v1851 = vmax.f32 %v1667, 0.0
        %v1852 = vmax.f32 %v1669, 0.0
        %v1853 = vmax.f32 %v1813, 0.0
        %v1854 = vmax.f32 %v1815, 0.0
        %v1855 = vmax.f32 %v1671, 0.0
        %v1856 = vmax.f32 %v1673, 0.0
        %v1857 = vmax.f32 %v1817, 0.0
        %v1858 = vmax.f32 %v1819, 0.0
        %v1859 = vmax.f32 %v1677, 0.0
        %v1860 = vmax.f32 %v1679, 0.0
        %v1861 = vmax.f32 %v1823, 0.0
        %v1862 = vmax.f32 %v1825, 0.0
        %v1863 = vmax.f32 %v1681, 0.0
        %v1864 = vmax.f32 %v1683, 0.0
        %v1865 = vmax.f32 %v1827, 0.0
        %v1866 = vmax.f32 %v1829, 0.0
        %v1867 = vmax.f32 %v1687, 0.0
        %v1868 = vmax.f32 %v1689, 0.0
        %v1869 = vmax.f32 %v1833, 0.0
        %v1870 = vmax.f32 %v1835, 0.0
        %v1871 = vmax.f32 %v1691, 0.0
        %v1872 = vmax.f32 %v1693, 0.0
        %v1873 = vmax.f32 %v1837, 0.0
        %v1874 = vmax.f32 %v1839, 0.0
        %v1875 = vmax.f32 %v1697, 0.0
        %v1876 = vmax.f32 %v1699, 0.0
        %v1877 = vmax.f32 %v1843, 0.0
        %v1878 = vmax.f32 %v1845, 0.0
        %v1879 = vmax.f32 %v1701, 0.0
        %v1880 = vmax.f32 %v1703, 0.0
        %v1881 = vmax.f32 %v1847, 0.0
        %v1882 = vmax.f32 %v1849, 0.0
        %v1883 = vld [vmem:[%s5] sm:$0xf]
        %v1885 = vlaneseq
        %v1886 = vshrl.u32 %v1885, 7
        %v1887 = vsub.s32 0, %v1886
        %v1888 = vrot.slane %v1883, %v1887
        %v1889 = vlaneseq
        %v1890 = vshrl.u32 %v1889, 7
        %v1891 = vsub.s32 1, %v1890
        %v1892 = vrot.slane %v1883, %v1891
        %v1893 = vlaneseq
        %v1894 = vshrl.u32 %v1893, 7
        %v1895 = vsub.s32 2, %v1894
        %v1896 = vrot.slane %v1883, %v1895
        %v1897 = vlaneseq
        %v1898 = vshrl.u32 %v1897, 7
        %v1899 = vsub.s32 3, %v1898
        %v1900 = vrot.slane %v1883, %v1899
        %v1905 = vmul.f32 %v1851, %v1888
        %v1906 = vmul.f32 %v1852, %v1892
        %v1907 = vmul.f32 %v1853, %v1896
        %v1908 = vmul.f32 %v1854, %v1900
        %v1909 = vmul.f32 %v1855, %v1888
        %v1910 = vmul.f32 %v1856, %v1892
        %v1911 = vmul.f32 %v1857, %v1896
        %v1912 = vmul.f32 %v1858, %v1900
        %v1913 = vmul.f32 %v1859, %v1888
        %v1914 = vmul.f32 %v1860, %v1892
        %v1915 = vmul.f32 %v1861, %v1896
        %v1916 = vmul.f32 %v1862, %v1900
        %v1917 = vmul.f32 %v1863, %v1888
        %v1918 = vmul.f32 %v1864, %v1892
        %v1919 = vmul.f32 %v1865, %v1896
        %v1920 = vmul.f32 %v1866, %v1900
        %v1921 = vmul.f32 %v1867, %v1888
        %v1922 = vmul.f32 %v1868, %v1892
        %v1923 = vmul.f32 %v1869, %v1896
        %v1924 = vmul.f32 %v1870, %v1900
        %v1925 = vmul.f32 %v1871, %v1888
        %v1926 = vmul.f32 %v1872, %v1892
        %v1927 = vmul.f32 %v1873, %v1896
        %v1928 = vmul.f32 %v1874, %v1900
        %v1929 = vmul.f32 %v1875, %v1888
        %v1930 = vmul.f32 %v1876, %v1892
        %v1931 = vmul.f32 %v1877, %v1896
        %v1932 = vmul.f32 %v1878, %v1900
        %v1933 = vmul.f32 %v1879, %v1888
        %v1934 = vmul.f32 %v1880, %v1892
        %v1935 = vmul.f32 %v1881, %v1896
        %v1936 = vmul.f32 %v1882, %v1900
        %v1937 = vld [vmem:[%s6] sm:$0xf]
        %v1939 = vlaneseq
        %v1940 = vshrl.u32 %v1939, 7
        %v1941 = vsub.s32 0, %v1940
        %v1942 = vrot.slane %v1937, %v1941
        %v1943 = vlaneseq
        %v1944 = vshrl.u32 %v1943, 7
        %v1945 = vsub.s32 1, %v1944
        %v1946 = vrot.slane %v1937, %v1945
        %v1947 = vlaneseq
        %v1948 = vshrl.u32 %v1947, 7
        %v1949 = vsub.s32 2, %v1948
        %v1950 = vrot.slane %v1937, %v1949
        %v1951 = vlaneseq
        %v1952 = vshrl.u32 %v1951, 7
        %v1953 = vsub.s32 3, %v1952
        %v1954 = vrot.slane %v1937, %v1953
        %v1959 = vadd.f32 %v1905, %v1942
        %v1960 = vadd.f32 %v1906, %v1946
        %v1961 = vadd.f32 %v1907, %v1950
        %v1962 = vadd.f32 %v1908, %v1954
        %v1963 = vadd.f32 %v1909, %v1942
        %v1964 = vadd.f32 %v1910, %v1946
        %v1965 = vadd.f32 %v1911, %v1950
        %v1966 = vadd.f32 %v1912, %v1954
        %v1967 = vadd.f32 %v1913, %v1942
        %v1968 = vadd.f32 %v1914, %v1946
        %v1969 = vadd.f32 %v1915, %v1950
        %v1970 = vadd.f32 %v1916, %v1954
        %v1971 = vadd.f32 %v1917, %v1942
        %v1972 = vadd.f32 %v1918, %v1946
        %v1973 = vadd.f32 %v1919, %v1950
        %v1974 = vadd.f32 %v1920, %v1954
        %v1975 = vadd.f32 %v1921, %v1942
        %v1976 = vadd.f32 %v1922, %v1946
        %v1977 = vadd.f32 %v1923, %v1950
        %v1978 = vadd.f32 %v1924, %v1954
        %v1979 = vadd.f32 %v1925, %v1942
        %v1980 = vadd.f32 %v1926, %v1946
        %v1981 = vadd.f32 %v1927, %v1950
        %v1982 = vadd.f32 %v1928, %v1954
        %v1983 = vadd.f32 %v1929, %v1942
        %v1984 = vadd.f32 %v1930, %v1946
        %v1985 = vadd.f32 %v1931, %v1950
        %v1986 = vadd.f32 %v1932, %v1954
        %v1987 = vadd.f32 %v1933, %v1942
        %v1988 = vadd.f32 %v1934, %v1946
        %v1989 = vadd.f32 %v1935, %v1950
        %v1990 = vadd.f32 %v1936, %v1954
        %v1991 = vmax.f32 %v1959, %v1961
        %v1992 = vmax.f32 %v1960, %v1962
        %v1993 = vmax.f32 %v1963, %v1965
        %v1994 = vmax.f32 %v1964, %v1966
        %v1995 = vmax.f32 %v1967, %v1969
        %v1996 = vmax.f32 %v1968, %v1970
        %v1997 = vmax.f32 %v1971, %v1973
        %v1998 = vmax.f32 %v1972, %v1974
        %v1999 = vmax.f32 %v1975, %v1977
        %v2000 = vmax.f32 %v1976, %v1978
        %v2001 = vmax.f32 %v1979, %v1981
        %v2002 = vmax.f32 %v1980, %v1982
        %v2003 = vmax.f32 %v1983, %v1985
        %v2004 = vmax.f32 %v1984, %v1986
        %v2005 = vmax.f32 %v1987, %v1989
        %v2006 = vmax.f32 %v1988, %v1990
        %v2007 = vmax.f32 %v1991, %v1992
        %v2008 = vmax.f32 %v1993, %v1994
        %v2009 = vmax.f32 %v1995, %v1996
        %v2010 = vmax.f32 %v1997, %v1998
        %v2011 = vmax.f32 %v1999, %v2000
        %v2012 = vmax.f32 %v2001, %v2002
        %v2013 = vmax.f32 %v2003, %v2004
        %v2014 = vmax.f32 %v2005, %v2006
        %2015 = vrot.lane.b32.xlu0 %v2007, 64
        %v2016 = vpop.permute.xlu0 %2015
        %2017 = vrot.lane.b32.xlu0 %v2008, 64
        %v2018 = vpop.permute.xlu0 %2017
        %2019 = vrot.lane.b32.xlu0 %v2009, 64
        %v2020 = vpop.permute.xlu0 %2019
        %2021 = vrot.lane.b32.xlu0 %v2010, 64
        %v2022 = vpop.permute.xlu0 %2021
        %2023 = vrot.lane.b32.xlu0 %v2011, 64
        %v2024 = vpop.permute.xlu0 %2023
        %2025 = vrot.lane.b32.xlu0 %v2012, 64
        %v2026 = vpop.permute.xlu0 %2025
        %2027 = vrot.lane.b32.xlu0 %v2013, 64
        %v2028 = vpop.permute.xlu0 %2027
        %2029 = vrot.lane.b32.xlu0 %v2014, 64
        %v2030 = vpop.permute.xlu0 %2029
        %v2031 = vmax.f32 %v2007, %v2016
        %v2032 = vmax.f32 %v2008, %v2018
        %v2033 = vmax.f32 %v2009, %v2020
        %v2034 = vmax.f32 %v2010, %v2022
        %v2035 = vmax.f32 %v2011, %v2024
        %v2036 = vmax.f32 %v2012, %v2026
        %v2037 = vmax.f32 %v2013, %v2028
        %v2038 = vmax.f32 %v2014, %v2030
        %2039 = vrot.lane.b32.xlu0 %v2031, 32
        %v2040 = vpop.permute.xlu0 %2039
        %2041 = vrot.lane.b32.xlu0 %v2032, 32
        %v2042 = vpop.permute.xlu0 %2041
        %2043 = vrot.lane.b32.xlu0 %v2033, 32
        %v2044 = vpop.permute.xlu0 %2043
        %2045 = vrot.lane.b32.xlu0 %v2034, 32
        %v2046 = vpop.permute.xlu0 %2045
        %2047 = vrot.lane.b32.xlu0 %v2035, 32
        %v2048 = vpop.permute.xlu0 %2047
        %2049 = vrot.lane.b32.xlu0 %v2036, 32
        %v2050 = vpop.permute.xlu0 %2049
        %2051 = vrot.lane.b32.xlu0 %v2037, 32
        %v2052 = vpop.permute.xlu0 %2051
        %2053 = vrot.lane.b32.xlu0 %v2038, 32
        %v2054 = vpop.permute.xlu0 %2053
        %v2055 = vmax.f32 %v2031, %v2040
        %v2056 = vmax.f32 %v2032, %v2042
        %v2057 = vmax.f32 %v2033, %v2044
        %v2058 = vmax.f32 %v2034, %v2046
        %v2059 = vmax.f32 %v2035, %v2048
        %v2060 = vmax.f32 %v2036, %v2050
        %v2061 = vmax.f32 %v2037, %v2052
        %v2062 = vmax.f32 %v2038, %v2054
        %v2071 = vcombine.high %v2055, %v2055
        %v2072 = vcombine.high %v2056, %v2056
        %v2073 = vcombine.high %v2057, %v2057
        %v2074 = vcombine.high %v2058, %v2058
        %v2075 = vcombine.high %v2059, %v2059
        %v2076 = vcombine.high %v2060, %v2060
        %v2077 = vcombine.high %v2061, %v2061
        %v2078 = vcombine.high %v2062, %v2062
        %vm2087 = vcmask 1043456
        %v2088 = vsel %vm2087, %v2055, -inf
        %v2089 = vrot.slane %v2088, 4
        %v2090 = vmax.f32 %v2088, %v2089
        %v2091 = vrot.slane %v2090, 2
        %v2092 = vmax.f32 %v2090, %v2091
        %v2093 = vrot.slane %v2092, 1
        %v2094 = vmax.f32 %v2092, %v2093
        %v2095 = vsel %vm2087, %v2071, -inf
        %v2096 = vrot.slane %v2095, 4
        %v2097 = vmax.f32 %v2095, %v2096
        %v2098 = vrot.slane %v2097, 2
        %v2099 = vmax.f32 %v2097, %v2098
        %v2100 = vrot.slane %v2099, 1
        %v2101 = vmax.f32 %v2099, %v2100
        %v2102 = vsel %vm2087, %v2056, -inf
        %v2103 = vrot.slane %v2102, 4
        %v2104 = vmax.f32 %v2102, %v2103
        %v2105 = vrot.slane %v2104, 2
        %v2106 = vmax.f32 %v2104, %v2105
        %v2107 = vrot.slane %v2106, 1
        %v2108 = vmax.f32 %v2106, %v2107
        %v2109 = vsel %vm2087, %v2072, -inf
        %v2110 = vrot.slane %v2109, 4
        %v2111 = vmax.f32 %v2109, %v2110
        %v2112 = vrot.slane %v2111, 2
        %v2113 = vmax.f32 %v2111, %v2112
        %v2114 = vrot.slane %v2113, 1
        %v2115 = vmax.f32 %v2113, %v2114
        %v2116 = vsel %vm2087, %v2057, -inf
        %v2117 = vrot.slane %v2116, 4
        %v2118 = vmax.f32 %v2116, %v2117
        %v2119 = vrot.slane %v2118, 2
        %v2120 = vmax.f32 %v2118, %v2119
        %v2121 = vrot.slane %v2120, 1
        %v2122 = vmax.f32 %v2120, %v2121
        %v2123 = vsel %vm2087, %v2073, -inf
        %v2124 = vrot.slane %v2123, 4
        %v2125 = vmax.f32 %v2123, %v2124
        %v2126 = vrot.slane %v2125, 2
        %v2127 = vmax.f32 %v2125, %v2126
        %v2128 = vrot.slane %v2127, 1
        %v2129 = vmax.f32 %v2127, %v2128
        %v2130 = vsel %vm2087, %v2058, -inf
        %v2131 = vrot.slane %v2130, 4
        %v2132 = vmax.f32 %v2130, %v2131
        %v2133 = vrot.slane %v2132, 2
        %v2134 = vmax.f32 %v2132, %v2133
        %v2135 = vrot.slane %v2134, 1
        %v2136 = vmax.f32 %v2134, %v2135
        %v2137 = vsel %vm2087, %v2074, -inf
        %v2138 = vrot.slane %v2137, 4
        %v2139 = vmax.f32 %v2137, %v2138
        %v2140 = vrot.slane %v2139, 2
        %v2141 = vmax.f32 %v2139, %v2140
        %v2142 = vrot.slane %v2141, 1
        %v2143 = vmax.f32 %v2141, %v2142
        %v2144 = vsel %vm2087, %v2059, -inf
        %v2145 = vrot.slane %v2144, 4
        %v2146 = vmax.f32 %v2144, %v2145
        %v2147 = vrot.slane %v2146, 2
        %v2148 = vmax.f32 %v2146, %v2147
        %v2149 = vrot.slane %v2148, 1
        %v2150 = vmax.f32 %v2148, %v2149
        %v2151 = vsel %vm2087, %v2075, -inf
        %v2152 = vrot.slane %v2151, 4
        %v2153 = vmax.f32 %v2151, %v2152
        %v2154 = vrot.slane %v2153, 2
        %v2155 = vmax.f32 %v2153, %v2154
        %v2156 = vrot.slane %v2155, 1
        %v2157 = vmax.f32 %v2155, %v2156
        %v2158 = vsel %vm2087, %v2060, -inf
        %v2159 = vrot.slane %v2158, 4
        %v2160 = vmax.f32 %v2158, %v2159
        %v2161 = vrot.slane %v2160, 2
        %v2162 = vmax.f32 %v2160, %v2161
        %v2163 = vrot.slane %v2162, 1
        %v2164 = vmax.f32 %v2162, %v2163
        %v2165 = vsel %vm2087, %v2076, -inf
        %v2166 = vrot.slane %v2165, 4
        %v2167 = vmax.f32 %v2165, %v2166
        %v2168 = vrot.slane %v2167, 2
        %v2169 = vmax.f32 %v2167, %v2168
        %v2170 = vrot.slane %v2169, 1
        %v2171 = vmax.f32 %v2169, %v2170
        %v2172 = vsel %vm2087, %v2061, -inf
        %v2173 = vrot.slane %v2172, 4
        %v2174 = vmax.f32 %v2172, %v2173
        %v2175 = vrot.slane %v2174, 2
        %v2176 = vmax.f32 %v2174, %v2175
        %v2177 = vrot.slane %v2176, 1
        %v2178 = vmax.f32 %v2176, %v2177
        %v2179 = vsel %vm2087, %v2077, -inf
        %v2180 = vrot.slane %v2179, 4
        %v2181 = vmax.f32 %v2179, %v2180
        %v2182 = vrot.slane %v2181, 2
        %v2183 = vmax.f32 %v2181, %v2182
        %v2184 = vrot.slane %v2183, 1
        %v2185 = vmax.f32 %v2183, %v2184
        %v2186 = vsel %vm2087, %v2062, -inf
        %v2187 = vrot.slane %v2186, 4
        %v2188 = vmax.f32 %v2186, %v2187
        %v2189 = vrot.slane %v2188, 2
        %v2190 = vmax.f32 %v2188, %v2189
        %v2191 = vrot.slane %v2190, 1
        %v2192 = vmax.f32 %v2190, %v2191
        %v2193 = vsel %vm2087, %v2078, -inf
        %v2194 = vrot.slane %v2193, 4
        %v2195 = vmax.f32 %v2193, %v2194
        %v2196 = vrot.slane %v2195, 2
        %v2197 = vmax.f32 %v2195, %v2196
        %v2198 = vrot.slane %v2197, 1
        %v2199 = vmax.f32 %v2197, %v2198
        %vm2216 = vcmask 1041409
        %v2217 = vsel %vm2216, %v2101, %v2094
        %vm2218 = vcmask 1042434
        %v2219 = vsel %vm2218, %v2108, %v2217
        %vm2220 = vcmask 1043459
        %v2221 = vsel %vm2220, %v2115, %v2219
        %vm2222 = vcmask 1044484
        %v2223 = vsel %vm2222, %v2122, %v2221
        %vm2224 = vcmask 1045509
        %v2225 = vsel %vm2224, %v2129, %v2223
        %vm2226 = vcmask 1046534
        %v2227 = vsel %vm2226, %v2136, %v2225
        %vm2228 = vcmask 1047559
        %v2229 = vsel %vm2228, %v2143, %v2227
        %v2230 = vsel %vm2216, %v2157, %v2150
        %v2231 = vsel %vm2218, %v2164, %v2230
        %v2232 = vsel %vm2220, %v2171, %v2231
        %v2233 = vsel %vm2222, %v2178, %v2232
        %v2234 = vsel %vm2224, %v2185, %v2233
        %v2235 = vsel %vm2226, %v2192, %v2234
        %v2236 = vsel %vm2228, %v2199, %v2235
        %2239 = vst [vmem:[%s325] sm:$0xff] %v2229
        %2240 = vst [vmem:[%s325 + $0x8] sm:$0xff] %v2236
        %s2241 = sand.u32 %s185, 1
        %s2242 = scalar_lea.sflag [#allocation4], %s2241
        %s2243 = sand.u32 %s185, 1
        %s2244 = smul.addr %s2243, 16
        %s2245 = scalar_lea.vmem [#allocation8], %s2244
        // Predicated region
        $region61: #{tpu_custom_call.1} parent=47 // pred_check
          %p2246 = pneg %p195
        $region62: #{tpu_custom_call.1} parent=47 // pred_check_branch
          %2248 = sbr.rel (%p2246) target = $region64
        $region63: #{tpu_custom_call.1} parent=47 // pred_region
          %s2249 = smul.u32 2, %s25
          %s2251 = ssub.s32 256, 256
          %2252 = vsyncadd %s2242, %s2251
          %s2253 = smul.addr %s2249, 128
          %s2254 = scalar_lea.hbm %s7, %s2253
          %s2255 = sshll.u32 %s2245, 4
          %s2256 = int_to_ptr.vmem [resolvable:$true] %s2255
          %2261 = dma.vmem_to_hbm [thread:$0]  %s2256, 256, %s2254, %s2242, 128, 128, 8
        $region64: #{tpu_custom_call.1} parent=47 // pred_fallthru
          _
      $region48: #{tpu_custom_call.1} parent=5 // pred_fallthru
        _
      %p2262 = scmp.le.s32.totalorder 2, %s20
      // Predicated region
      $region65: #{tpu_custom_call.1} parent=5 // pred_check
        %p2263 = pneg %p2262
      $region66: #{tpu_custom_call.1} parent=5 // pred_check_branch
        %2265 = sbr.rel (%p2263) target = $region68
      $region67: #{tpu_custom_call.1} parent=5 // pred_region
        %s2266 = ssub.s32 %s20, 2
        // Predicated region
        $region69: #{tpu_custom_call.1} parent=67 // pred_check
          %p2267 = pneg %p201
        $region70: #{tpu_custom_call.1} parent=67 // pred_check_branch
          %2269 = sbr.rel (%p2267) target = $region72
        $region71: #{tpu_custom_call.1} parent=67 // pred_region
          %s2270 = sand.u32 %s186, 1
          %s2271 = scalar_lea.sflag [#allocation4], %s2270
          %s2272 = sand.u32 %s186, 1
          %s2273 = smul.addr %s2272, 16
          %s2274 = scalar_lea.vmem [#allocation8], %s2273
          %2275 = dma.done %s2271, 256
        $region72: #{tpu_custom_call.1} parent=67 // pred_fallthru
          _
      $region68: #{tpu_custom_call.1} parent=5 // pred_fallthru
        _
    $region6: #{tpu_custom_call.1} parent=1 // loop_footer
      %s24 = sadd.s32 1, %s20
    $region7: #{tpu_custom_call.1} parent=1 // loop_footer_branch
      %19 = sbr.rel target = $region3
    $region8: #{tpu_custom_call.1} parent=1 // loop_exit
      _
    %2276 = vsyncpa [#allocation3], 1
    %s2277 = scalar_lea.sflag [#allocation3], 1
    %2278 = vsyncpa %s2277, 1
    %2279 = vsyncpa [#allocation6], 1
    %2280 = vsyncpa [#allocation4], 1
    %s2281 = scalar_lea.sflag [#allocation4], 1
    %2282 = vsyncpa %s2281, 1

</llo_original>
